<compile_context>
chip_gen: v7x
topology: tpu7x:2x2x1
jax: 0.10.0
libtpu: 0.0.40
codegen_flags: <defaults>
</compile_context>

<pallas_src>
import functools

import jax
import jax.numpy as jnp
from jax.experimental import pallas as pl
from jax.experimental.pallas import tpu as pltpu


def _mha_kernel(x_ref, wqkv_ref, bqkv_ref, wo_ref, bo_ref, *rest,
                n_heads, d_k, d_v, return_attn):
    """One batch block (Bt sequences) per grid step.

    x_ref    : (Bt, S, D)           input sequences (f32)
    wqkv_ref : (D, 2*H*dk + H*dv)   fused [W_Q|W_K|W_V] (bf16, scale folded into W_Q)
    bqkv_ref : (1, 2*H*dk + H*dv)   fused biases (f32)
    wo_ref   : (H*dv, D)            output projection weight (bf16)
    bo_ref   : (1, D)               output projection bias (f32)
    out_ref  : (Bt, S, D)           final output (f32)
    attn_ref : (Bt, H, S, S)        softmax weights (bf16) -- only if return_attn
    ctx_ref  : (Bt*S, H*dv)         bf16 VMEM scratch slab for per-head contexts
    """
    if return_attn:
        out_ref, attn_ref, ctx_ref = rest
    else:
        out_ref, ctx_ref = rest
        attn_ref = None

    Bt, S, D = x_ref.shape
    H, HK = n_heads, n_heads * d_k

    # Fold the batch block into the matmul M dim. (Free reshape when S is a
    # multiple of the 8-sublane tile; still correct otherwise.)
    x2d = x_ref[...].reshape(Bt * S, D).astype(jnp.bfloat16)

    # One fused QKV projection; cast to bf16 once -- only bf16 copies stay live
    # through the statically-unrolled head loop.
    qkv = jnp.dot(x2d, wqkv_ref[...], preferred_element_type=jnp.float32)
    qkv = (qkv + bqkv_ref[...]).astype(jnp.bfloat16)
    q = qkv[:, :HK]          # (Bt*S, H*dk)  softmax scale already folded in
    k = qkv[:, HK:2 * HK]    # (Bt*S, H*dk)
    v = qkv[:, 2 * HK:]      # (Bt*S, H*dv)

    for h in range(H):       # static unroll over heads (H is small)
        q_h = q[:, h * d_k:(h + 1) * d_k].reshape(Bt, S, d_k)
        k_h = k[:, h * d_k:(h + 1) * d_k].reshape(Bt, S, d_k)
        v_h = v[:, h * d_v:(h + 1) * d_v].reshape(Bt, S, d_v)

        # scores = q_h @ k_h^T per batch element, no materialized transpose.
        scores = jax.lax.dot_general(
            q_h, k_h, (((2,), (2,)), ((0,), (0,))),
            preferred_element_type=jnp.float32)                 # (Bt, S, S)

        # softmax along the key axis (f32); reciprocal on the EUP slot.
        # (approx recip error << bf16 rounding of the stored weights)
        m = jnp.max(scores, axis=-1, keepdims=True)
        e = jnp.exp(scores - m)
        l = jnp.sum(e, axis=-1, keepdims=True)
        attn = e * pl.reciprocal(l, approx=True)                # (Bt, S, S)

        if attn_ref is not None:
            # bf16 store: halves the attn writeback (the dominant HBM term).
            attn_ref[:, h, :, :] = attn.astype(attn_ref.dtype)
        # attn_dropout is p=0.0 -> identity.

        ctx = jax.lax.dot_general(
            attn.astype(jnp.bfloat16), v_h, (((2,), (1,)), ((0,), (0,))),
            preferred_element_type=jnp.float32)                 # (Bt, S, dv)

        # Stage ctx_h into the VMEM slab -> one full-K output projection below
        # instead of H small-K matmuls / a traced f32 accumulator.
        ctx_ref[:, h * d_v:(h + 1) * d_v] = (
            ctx.reshape(Bt * S, d_v).astype(jnp.bfloat16))

    # Output projection with full K = H*dv; proj_dropout is p=0.0 -> identity.
    out2d = jnp.dot(ctx_ref[...], wo_ref[...],
                    preferred_element_type=jnp.float32) + bo_ref[...]
    out_ref[...] = out2d.reshape(Bt, S, D)


def multihead_attention_pallas(x, params, n_heads, d_k, d_v, *,
                               batch_block=None, return_attn=True,
                               attn_dtype=jnp.bfloat16):
    bs, S, D = x.shape
    wq, bq, wk, bk, wv, bv, wo, bo = params

    # Matches _ScaledDotProductAttention (lsa=False): scale = (d_model // n_heads) ** -0.5
    scale = float(D // n_heads) ** -0.5
    # Fold the scale into the Q projection outside the kernel (zero in-kernel cost).
    wq = wq * scale
    bq = bq * scale

    # Fuse Q/K/V projections; pre-cast matmul weights to bf16 (half the weight
    # DMA + VMEM, no in-kernel casts). Biases stay f32 (added to f32 accumulators).
    wqkv = jnp.concatenate([wq, wk, wv], axis=1).astype(jnp.bfloat16)  # (D, 2*H*dk+H*dv)
    bqkv = jnp.concatenate([bq, bk, bv], axis=1).astype(jnp.float32)   # (1, 2*H*dk+H*dv)
    wo_bf = wo.astype(jnp.bfloat16)                                    # (H*dv, D)
    bo_f32 = bo.astype(jnp.float32)                                    # (1, D)

    # Megacore: default to >= 2 grid steps so the "parallel" batch axis can be
    # sharded across both v7x TensorCores.
    if batch_block is None:
        batch_block = bs // 2 if (bs % 2 == 0 and bs >= 2) else bs
    assert bs % batch_block == 0, "batch_block must divide batch size"
    Bt = batch_block

    def est_bytes(bt):
        x_blk = bt * S * D * 4
        out_blk = bt * S * D * 4
        attn_blk = bt * n_heads * S * S * 2 if return_attn else 0
        w_bytes = int(wqkv.size) * 2 + int(bqkv.size) * 4 \
            + int(wo_bf.size) * 2 + int(bo_f32.size) * 4
        scr = bt * S * n_heads * d_v * 2
        # pipelined blocks (and, by default, the grid-invariant weights) are
        # double-buffered.
        return 2 * (x_blk + out_blk + attn_blk + w_bytes) + scr

    # Shrink Bt if the per-step footprint would blow the smallest VMEM (v7x 64 MiB).
    _BUDGET = 48 * 1024 * 1024
    while Bt > 1 and Bt % 2 == 0 and est_bytes(Bt) > _BUDGET:
        Bt //= 2
    grid = (bs // Bt,)

    # Explicit scoped-VMEM limit: >= 32 MiB (above v5e's 16 MiB default), never
    # above v7x's 64 MiB physical.
    vmem_limit = int(min(64 * 1024 * 1024,
                         max(32 * 1024 * 1024, 2 * est_bytes(Bt))))

    kernel = functools.partial(_mha_kernel, n_heads=n_heads, d_k=d_k, d_v=d_v,
                               return_attn=return_attn)

    def const_spec(arr):
        n = arr.ndim
        # Grid-invariant (constant index_map) -> never re-DMA'd across steps.
        return pl.BlockSpec(arr.shape, lambda b, _n=n: (0,) * _n)

    if return_attn:
        out_shape = (
            jax.ShapeDtypeStruct((bs, S, D), jnp.float32),
            jax.ShapeDtypeStruct((bs, n_heads, S, S), attn_dtype),
        )
        out_specs = (
            pl.BlockSpec((Bt, S, D), lambda b: (b, 0, 0)),
            pl.BlockSpec((Bt, n_heads, S, S), lambda b: (b, 0, 0, 0)),
        )
    else:
        out_shape = jax.ShapeDtypeStruct((bs, S, D), jnp.float32)
        out_specs = pl.BlockSpec((Bt, S, D), lambda b: (b, 0, 0))

    return pl.pallas_call(
        kernel,
        out_shape=out_shape,
        grid=grid,
        in_specs=[
            pl.BlockSpec((Bt, S, D), lambda b: (b, 0, 0)),
            const_spec(wqkv), const_spec(bqkv),
            const_spec(wo_bf), const_spec(bo_f32),
        ],
        out_specs=out_specs,
        scratch_shapes=[pltpu.VMEM((Bt * S, n_heads * d_v), jnp.bfloat16)],
        compiler_params=pltpu.CompilerParams(
            # Batch blocks are fully independent -> shard across TensorCores (v7x).
            dimension_semantics=("parallel",),
            vmem_limit_bytes=vmem_limit,
        ),
    )(x, wqkv, bqkv, wo_bf, bo_f32)


def multihead_attention_ref(x, params, n_heads, d_k, d_v):
    """Pure-JAX f32 reference mirroring the PyTorch forward (eval mode, no masks)."""
    wq, bq, wk, bk, wv, bv, wo, bo = params
    bs, S, D = x.shape
    scale = float(D // n_heads) ** -0.5

    q = x @ wq + bq   # (bs, S, H*dk)
    k = x @ wk + bk
    v = x @ wv + bv

    q = q.reshape(bs, S, n_heads, d_k).transpose(0, 2, 1, 3)   # (bs, H, S, dk)
    k = k.reshape(bs, S, n_heads, d_k).transpose(0, 2, 3, 1)   # (bs, H, dk, S)
    v = v.reshape(bs, S, n_heads, d_v).transpose(0, 2, 1, 3)   # (bs, H, S, dv)

    scores = jnp.einsum('bhqd,bhdk->bhqk', q, k) * scale
    attn = jax.nn.softmax(scores, axis=-1)
    out = jnp.einsum('bhqk,bhkd->bhqd', attn, v)               # (bs, H, S, dv)
    out = out.transpose(0, 2, 1, 3).reshape(bs, S, n_heads * d_v)
    out = out @ wo + bo
    return out, attn


def init_params(key, d_model, n_heads, d_k, d_v):
    ks = jax.random.split(key, 8)
    s = 0.02
    wq = s * jax.random.normal(ks[0], (d_model, n_heads * d_k), jnp.float32)
    bq = s * jax.random.normal(ks[1], (1, n_heads * d_k), jnp.float32)
    wk = s * jax.random.normal(ks[2], (d_model, n_heads * d_k), jnp.float32)
    bk = s * jax.random.normal(ks[3], (1, n_heads * d_k), jnp.float32)
    wv = s * jax.random.normal(ks[4], (d_model, n_heads * d_v), jnp.float32)
    bv = s * jax.random.normal(ks[5], (1, n_heads * d_v), jnp.float32)
    wo = s * jax.random.normal(ks[6], (n_heads * d_v, d_model), jnp.float32)
    bo = s * jax.random.normal(ks[7], (1, d_model), jnp.float32)
    return (wq, bq, wk, bk, wv, bv, wo, bo)


if __name__ == "__main__":
    # Small shapes implied by the module: Q: [bs x seq_len x d_model]
    bs, seq_len, d_model, n_heads = 4, 8, 32, 4
    d_k = d_v = d_model // n_heads

    key = jax.random.PRNGKey(0)
    k_x, k_p = jax.random.split(key)
    x = jax.random.normal(k_x, (bs, seq_len, d_model), jnp.float32)
    params = init_params(k_p, d_model, n_heads, d_k, d_v)

    # Default batch_block -> grid=(2,), exercising the "parallel" batch grid axis.
    out, attn = multihead_attention_pallas(x, params, n_heads, d_k, d_v)
    out = jax.block_until_ready(out)
    attn = jax.block_until_ready(attn)

    # Also exercise the "no attention-weights writeback" fast path.
    out_no_attn = multihead_attention_pallas(x, params, n_heads, d_k, d_v,
                                             return_attn=False)
    out_no_attn = jax.block_until_ready(out_no_attn)

    out_ref, attn_ref = multihead_attention_ref(x, params, n_heads, d_k, d_v)
    assert out.shape == (bs, seq_len, d_model)
    assert attn.shape == (bs, n_heads, seq_len, seq_len)
    # bf16 MXU operands + bf16 attn output + approx reciprocal -> loose tolerance.
    assert jnp.allclose(out, out_ref, atol=2e-2, rtol=2e-2), \
        float(jnp.max(jnp.abs(out - out_ref)))
    assert jnp.allclose(attn.astype(jnp.float32), attn_ref, atol=2e-2, rtol=2e-2), \
        float(jnp.max(jnp.abs(attn.astype(jnp.float32) - attn_ref)))
    assert jnp.allclose(out_no_attn, out_ref, atol=2e-2, rtol=2e-2), \
        float(jnp.max(jnp.abs(out_no_attn - out_ref)))

    print("KERNEL_OK")
</pallas_src>

<mosaic_0001>
module attributes {stable_mosaic.version = 11 : i64} {
  func.func @_mha_kernel(%arg0: i32, %arg1: memref<2x8x32xf32, #tpu.memory_space<vmem>>, %arg2: memref<32x96xbf16, #tpu.memory_space<vmem>>, %arg3: memref<1x96xf32, #tpu.memory_space<vmem>>, %arg4: memref<32x32xbf16, #tpu.memory_space<vmem>>, %arg5: memref<1x32xf32, #tpu.memory_space<vmem>>, %arg6: memref<2x8x32xf32, #tpu.memory_space<vmem>>, %arg7: memref<2x4x8x8xbf16, #tpu.memory_space<vmem>>, %arg8: memref<16x32xbf16, #tpu.memory_space<vmem>>) attributes {dimension_semantics = [#tpu.dimension_semantics<parallel>], iteration_bounds = array<i64: 2>, scalar_prefetch = 0 : i64, scratch_operands = 1 : i64, tpu.core_type = #tpu.core_type<tc>, window_params = [{transform_indices = @transform_0, window_bounds = array<i64: 2, 8, 32>}, {pipeline_mode = #tpu.pipeline_mode<synchronous>, transform_indices = @transform_1, window_bounds = array<i64: 32, 96>}, {pipeline_mode = #tpu.pipeline_mode<synchronous>, transform_indices = @transform_2, window_bounds = array<i64: 1, 96>}, {pipeline_mode = #tpu.pipeline_mode<synchronous>, transform_indices = @transform_3, window_bounds = array<i64: 32, 32>}, {pipeline_mode = #tpu.pipeline_mode<synchronous>, transform_indices = @transform_4, window_bounds = array<i64: 1, 32>}, {transform_indices = @transform_5, window_bounds = array<i64: 2, 8, 32>}, {transform_indices = @transform_6, window_bounds = array<i64: 2, 4, 8, 8>}]} {
    %c0 = arith.constant 0 : index
    %c0_0 = arith.constant 0 : index
    %c0_1 = arith.constant 0 : index
    %0 = vector.load %arg1[%c0, %c0_0, %c0_1] : memref<2x8x32xf32, #tpu.memory_space<vmem>>, vector<2x8x32xf32>
    %1 = vector.shape_cast %0 : vector<2x8x32xf32> to vector<16x32xf32>
    %2 = arith.truncf %1 : vector<16x32xf32> to vector<16x32xbf16>
    %c0_2 = arith.constant 0 : index
    %c0_3 = arith.constant 0 : index
    %3 = vector.load %arg2[%c0_2, %c0_3] : memref<32x96xbf16, #tpu.memory_space<vmem>>, vector<32x96xbf16>
    %cst = arith.constant dense<0.000000e+00> : vector<16x96xf32>
    %4 = tpu.matmul %2, %3, %cst {dimension_numbers = #tpu.dot_dimension_numbers<[1], [0], [0], [1], [0, 0, 1, 1], [], []>} : vector<16x32xbf16>, vector<32x96xbf16>, vector<16x96xf32> -> vector<16x96xf32>
    %c0_4 = arith.constant 0 : index
    %c0_5 = arith.constant 0 : index
    %5 = vector.load %arg3[%c0_4, %c0_5] : memref<1x96xf32, #tpu.memory_space<vmem>>, vector<1x96xf32>
    %6 = vector.broadcast %5 : vector<1x96xf32> to vector<16x96xf32>
    %7 = arith.addf %4, %6 : vector<16x96xf32>
    %8 = arith.truncf %7 : vector<16x96xf32> to vector<16x96xbf16>
    %9 = vector.extract_strided_slice %8 {offsets = [0, 0], sizes = [16, 32], strides = [1, 1]} : vector<16x96xbf16> to vector<16x32xbf16>
    %10 = vector.extract_strided_slice %8 {offsets = [0, 32], sizes = [16, 32], strides = [1, 1]} : vector<16x96xbf16> to vector<16x32xbf16>
    %11 = vector.extract_strided_slice %8 {offsets = [0, 64], sizes = [16, 32], strides = [1, 1]} : vector<16x96xbf16> to vector<16x32xbf16>
    %12 = vector.extract_strided_slice %9 {offsets = [0, 0], sizes = [16, 8], strides = [1, 1]} : vector<16x32xbf16> to vector<16x8xbf16>
    %13 = vector.shape_cast %12 : vector<16x8xbf16> to vector<2x8x8xbf16>
    %14 = vector.extract_strided_slice %10 {offsets = [0, 0], sizes = [16, 8], strides = [1, 1]} : vector<16x32xbf16> to vector<16x8xbf16>
    %15 = vector.shape_cast %14 : vector<16x8xbf16> to vector<2x8x8xbf16>
    %16 = vector.extract_strided_slice %11 {offsets = [0, 0], sizes = [16, 8], strides = [1, 1]} : vector<16x32xbf16> to vector<16x8xbf16>
    %17 = vector.shape_cast %16 : vector<16x8xbf16> to vector<2x8x8xbf16>
    %cst_6 = arith.constant dense<0.000000e+00> : vector<2x8x8xf32>
    %18 = tpu.matmul %13, %15, %cst_6 {dimension_numbers = #tpu.dot_dimension_numbers<[2], [2], [1], [1], [0, 0, 0, 1, 1, 1], [0], [0]>} : vector<2x8x8xbf16>, vector<2x8x8xbf16>, vector<2x8x8xf32> -> vector<2x8x8xf32>
    %cst_7 = arith.constant dense<0xFF800000> : vector<2x8xf32>
    %19 = vector.multi_reduction <maximumf>, %18, %cst_7 [2] : vector<2x8x8xf32> to vector<2x8xf32>
    %20 = vector.shape_cast %19 : vector<2x8xf32> to vector<2x8x1xf32>
    %21 = vector.broadcast %20 : vector<2x8x1xf32> to vector<2x8x8xf32>
    %22 = arith.subf %18, %21 : vector<2x8x8xf32>
    %23 = math.exp %22 : vector<2x8x8xf32>
    %cst_8 = arith.constant dense<0.000000e+00> : vector<2x8xf32>
    %24 = vector.multi_reduction <add>, %23, %cst_8 [2] : vector<2x8x8xf32> to vector<2x8xf32>
    %25 = vector.shape_cast %24 : vector<2x8xf32> to vector<2x8x1xf32>
    %26 = tpu.reciprocal %25 {approx = true} : vector<2x8x1xf32> -> vector<2x8x1xf32>
    %27 = vector.broadcast %26 : vector<2x8x1xf32> to vector<2x8x8xf32>
    %28 = arith.mulf %23, %27 : vector<2x8x8xf32>
    %29 = arith.truncf %28 : vector<2x8x8xf32> to vector<2x8x8xbf16>
    %c0_9 = arith.constant 0 : index
    %c0_10 = arith.constant 0 : index
    %c0_11 = arith.constant 0 : index
    %c0_12 = arith.constant 0 : index
    %30 = vector.load %arg7[%c0_9, %c0_10, %c0_11, %c0_12] : memref<2x4x8x8xbf16, #tpu.memory_space<vmem>>, vector<2x1x8x8xbf16>
    %31 = vector.shape_cast %30 : vector<2x1x8x8xbf16> to vector<2x8x8xbf16>
    %32 = vector.shape_cast %29 : vector<2x8x8xbf16> to vector<2x1x8x8xbf16>
    tpu.vector_store %arg7[%c0_9, %c0_10, %c0_11, %c0_12], %32 {strides = array<i32>} : memref<2x4x8x8xbf16, #tpu.memory_space<vmem>>, vector<2x1x8x8xbf16>,
    %33 = arith.truncf %28 : vector<2x8x8xf32> to vector<2x8x8xbf16>
    %cst_13 = arith.constant dense<0.000000e+00> : vector<2x8x8xf32>
    %34 = tpu.matmul %33, %17, %cst_13 {dimension_numbers = #tpu.dot_dimension_numbers<[2], [1], [1], [2], [0, 0, 0, 1, 1, 2], [0], [0]>} : vector<2x8x8xbf16>, vector<2x8x8xbf16>, vector<2x8x8xf32> -> vector<2x8x8xf32>
    %35 = vector.shape_cast %34 : vector<2x8x8xf32> to vector<16x8xf32>
    %36 = arith.truncf %35 : vector<16x8xf32> to vector<16x8xbf16>
    %c0_14 = arith.constant 0 : index
    %c0_15 = arith.constant 0 : index
    %37 = vector.load %arg8[%c0_14, %c0_15] : memref<16x32xbf16, #tpu.memory_space<vmem>>, vector<16x8xbf16>
    tpu.vector_store %arg8[%c0_14, %c0_15], %36 {strides = array<i32>} : memref<16x32xbf16, #tpu.memory_space<vmem>>, vector<16x8xbf16>,
    %38 = vector.extract_strided_slice %9 {offsets = [0, 8], sizes = [16, 8], strides = [1, 1]} : vector<16x32xbf16> to vector<16x8xbf16>
    %39 = vector.shape_cast %38 : vector<16x8xbf16> to vector<2x8x8xbf16>
    %40 = vector.extract_strided_slice %10 {offsets = [0, 8], sizes = [16, 8], strides = [1, 1]} : vector<16x32xbf16> to vector<16x8xbf16>
    %41 = vector.shape_cast %40 : vector<16x8xbf16> to vector<2x8x8xbf16>
    %42 = vector.extract_strided_slice %11 {offsets = [0, 8], sizes = [16, 8], strides = [1, 1]} : vector<16x32xbf16> to vector<16x8xbf16>
    %43 = vector.shape_cast %42 : vector<16x8xbf16> to vector<2x8x8xbf16>
    %cst_16 = arith.constant dense<0.000000e+00> : vector<2x8x8xf32>
    %44 = tpu.matmul %39, %41, %cst_16 {dimension_numbers = #tpu.dot_dimension_numbers<[2], [2], [1], [1], [0, 0, 0, 1, 1, 1], [0], [0]>} : vector<2x8x8xbf16>, vector<2x8x8xbf16>, vector<2x8x8xf32> -> vector<2x8x8xf32>
    %cst_17 = arith.constant dense<0xFF800000> : vector<2x8xf32>
    %45 = vector.multi_reduction <maximumf>, %44, %cst_17 [2] : vector<2x8x8xf32> to vector<2x8xf32>
    %46 = vector.shape_cast %45 : vector<2x8xf32> to vector<2x8x1xf32>
    %47 = vector.broadcast %46 : vector<2x8x1xf32> to vector<2x8x8xf32>
    %48 = arith.subf %44, %47 : vector<2x8x8xf32>
    %49 = math.exp %48 : vector<2x8x8xf32>
    %cst_18 = arith.constant dense<0.000000e+00> : vector<2x8xf32>
    %50 = vector.multi_reduction <add>, %49, %cst_18 [2] : vector<2x8x8xf32> to vector<2x8xf32>
    %51 = vector.shape_cast %50 : vector<2x8xf32> to vector<2x8x1xf32>
    %52 = tpu.reciprocal %51 {approx = true} : vector<2x8x1xf32> -> vector<2x8x1xf32>
    %53 = vector.broadcast %52 : vector<2x8x1xf32> to vector<2x8x8xf32>
    %54 = arith.mulf %49, %53 : vector<2x8x8xf32>
    %55 = arith.truncf %54 : vector<2x8x8xf32> to vector<2x8x8xbf16>
    %c0_19 = arith.constant 0 : index
    %c1 = arith.constant 1 : index
    %c0_20 = arith.constant 0 : index
    %c0_21 = arith.constant 0 : index
    %56 = vector.load %arg7[%c0_19, %c1, %c0_20, %c0_21] : memref<2x4x8x8xbf16, #tpu.memory_space<vmem>>, vector<2x1x8x8xbf16>
    %57 = vector.shape_cast %56 : vector<2x1x8x8xbf16> to vector<2x8x8xbf16>
    %58 = vector.shape_cast %55 : vector<2x8x8xbf16> to vector<2x1x8x8xbf16>
    tpu.vector_store %arg7[%c0_19, %c1, %c0_20, %c0_21], %58 {strides = array<i32>} : memref<2x4x8x8xbf16, #tpu.memory_space<vmem>>, vector<2x1x8x8xbf16>,
    %59 = arith.truncf %54 : vector<2x8x8xf32> to vector<2x8x8xbf16>
    %cst_22 = arith.constant dense<0.000000e+00> : vector<2x8x8xf32>
    %60 = tpu.matmul %59, %43, %cst_22 {dimension_numbers = #tpu.dot_dimension_numbers<[2], [1], [1], [2], [0, 0, 0, 1, 1, 2], [0], [0]>} : vector<2x8x8xbf16>, vector<2x8x8xbf16>, vector<2x8x8xf32> -> vector<2x8x8xf32>
    %61 = vector.shape_cast %60 : vector<2x8x8xf32> to vector<16x8xf32>
    %62 = arith.truncf %61 : vector<16x8xf32> to vector<16x8xbf16>
    %c0_23 = arith.constant 0 : index
    %c8 = arith.constant 8 : index
    %63 = vector.load %arg8[%c0_23, %c8] : memref<16x32xbf16, #tpu.memory_space<vmem>>, vector<16x8xbf16>
    tpu.vector_store %arg8[%c0_23, %c8], %62 {strides = array<i32>} : memref<16x32xbf16, #tpu.memory_space<vmem>>, vector<16x8xbf16>,
    %64 = vector.extract_strided_slice %9 {offsets = [0, 16], sizes = [16, 8], strides = [1, 1]} : vector<16x32xbf16> to vector<16x8xbf16>
    %65 = vector.shape_cast %64 : vector<16x8xbf16> to vector<2x8x8xbf16>
    %66 = vector.extract_strided_slice %10 {offsets = [0, 16], sizes = [16, 8], strides = [1, 1]} : vector<16x32xbf16> to vector<16x8xbf16>
    %67 = vector.shape_cast %66 : vector<16x8xbf16> to vector<2x8x8xbf16>
    %68 = vector.extract_strided_slice %11 {offsets = [0, 16], sizes = [16, 8], strides = [1, 1]} : vector<16x32xbf16> to vector<16x8xbf16>
    %69 = vector.shape_cast %68 : vector<16x8xbf16> to vector<2x8x8xbf16>
    %cst_24 = arith.constant dense<0.000000e+00> : vector<2x8x8xf32>
    %70 = tpu.matmul %65, %67, %cst_24 {dimension_numbers = #tpu.dot_dimension_numbers<[2], [2], [1], [1], [0, 0, 0, 1, 1, 1], [0], [0]>} : vector<2x8x8xbf16>, vector<2x8x8xbf16>, vector<2x8x8xf32> -> vector<2x8x8xf32>
    %cst_25 = arith.constant dense<0xFF800000> : vector<2x8xf32>
    %71 = vector.multi_reduction <maximumf>, %70, %cst_25 [2] : vector<2x8x8xf32> to vector<2x8xf32>
    %72 = vector.shape_cast %71 : vector<2x8xf32> to vector<2x8x1xf32>
    %73 = vector.broadcast %72 : vector<2x8x1xf32> to vector<2x8x8xf32>
    %74 = arith.subf %70, %73 : vector<2x8x8xf32>
    %75 = math.exp %74 : vector<2x8x8xf32>
    %cst_26 = arith.constant dense<0.000000e+00> : vector<2x8xf32>
    %76 = vector.multi_reduction <add>, %75, %cst_26 [2] : vector<2x8x8xf32> to vector<2x8xf32>
    %77 = vector.shape_cast %76 : vector<2x8xf32> to vector<2x8x1xf32>
    %78 = tpu.reciprocal %77 {approx = true} : vector<2x8x1xf32> -> vector<2x8x1xf32>
    %79 = vector.broadcast %78 : vector<2x8x1xf32> to vector<2x8x8xf32>
    %80 = arith.mulf %75, %79 : vector<2x8x8xf32>
    %81 = arith.truncf %80 : vector<2x8x8xf32> to vector<2x8x8xbf16>
    %c0_27 = arith.constant 0 : index
    %c2 = arith.constant 2 : index
    %c0_28 = arith.constant 0 : index
    %c0_29 = arith.constant 0 : index
    %82 = vector.load %arg7[%c0_27, %c2, %c0_28, %c0_29] : memref<2x4x8x8xbf16, #tpu.memory_space<vmem>>, vector<2x1x8x8xbf16>
    %83 = vector.shape_cast %82 : vector<2x1x8x8xbf16> to vector<2x8x8xbf16>
    %84 = vector.shape_cast %81 : vector<2x8x8xbf16> to vector<2x1x8x8xbf16>
    tpu.vector_store %arg7[%c0_27, %c2, %c0_28, %c0_29], %84 {strides = array<i32>} : memref<2x4x8x8xbf16, #tpu.memory_space<vmem>>, vector<2x1x8x8xbf16>,
    %85 = arith.truncf %80 : vector<2x8x8xf32> to vector<2x8x8xbf16>
    %cst_30 = arith.constant dense<0.000000e+00> : vector<2x8x8xf32>
    %86 = tpu.matmul %85, %69, %cst_30 {dimension_numbers = #tpu.dot_dimension_numbers<[2], [1], [1], [2], [0, 0, 0, 1, 1, 2], [0], [0]>} : vector<2x8x8xbf16>, vector<2x8x8xbf16>, vector<2x8x8xf32> -> vector<2x8x8xf32>
    %87 = vector.shape_cast %86 : vector<2x8x8xf32> to vector<16x8xf32>
    %88 = arith.truncf %87 : vector<16x8xf32> to vector<16x8xbf16>
    %c0_31 = arith.constant 0 : index
    %c16 = arith.constant 16 : index
    %89 = vector.load %arg8[%c0_31, %c16] : memref<16x32xbf16, #tpu.memory_space<vmem>>, vector<16x8xbf16>
    tpu.vector_store %arg8[%c0_31, %c16], %88 {strides = array<i32>} : memref<16x32xbf16, #tpu.memory_space<vmem>>, vector<16x8xbf16>,
    %90 = vector.extract_strided_slice %9 {offsets = [0, 24], sizes = [16, 8], strides = [1, 1]} : vector<16x32xbf16> to vector<16x8xbf16>
    %91 = vector.shape_cast %90 : vector<16x8xbf16> to vector<2x8x8xbf16>
    %92 = vector.extract_strided_slice %10 {offsets = [0, 24], sizes = [16, 8], strides = [1, 1]} : vector<16x32xbf16> to vector<16x8xbf16>
    %93 = vector.shape_cast %92 : vector<16x8xbf16> to vector<2x8x8xbf16>
    %94 = vector.extract_strided_slice %11 {offsets = [0, 24], sizes = [16, 8], strides = [1, 1]} : vector<16x32xbf16> to vector<16x8xbf16>
    %95 = vector.shape_cast %94 : vector<16x8xbf16> to vector<2x8x8xbf16>
    %cst_32 = arith.constant dense<0.000000e+00> : vector<2x8x8xf32>
    %96 = tpu.matmul %91, %93, %cst_32 {dimension_numbers = #tpu.dot_dimension_numbers<[2], [2], [1], [1], [0, 0, 0, 1, 1, 1], [0], [0]>} : vector<2x8x8xbf16>, vector<2x8x8xbf16>, vector<2x8x8xf32> -> vector<2x8x8xf32>
    %cst_33 = arith.constant dense<0xFF800000> : vector<2x8xf32>
    %97 = vector.multi_reduction <maximumf>, %96, %cst_33 [2] : vector<2x8x8xf32> to vector<2x8xf32>
    %98 = vector.shape_cast %97 : vector<2x8xf32> to vector<2x8x1xf32>
    %99 = vector.broadcast %98 : vector<2x8x1xf32> to vector<2x8x8xf32>
    %100 = arith.subf %96, %99 : vector<2x8x8xf32>
    %101 = math.exp %100 : vector<2x8x8xf32>
    %cst_34 = arith.constant dense<0.000000e+00> : vector<2x8xf32>
    %102 = vector.multi_reduction <add>, %101, %cst_34 [2] : vector<2x8x8xf32> to vector<2x8xf32>
    %103 = vector.shape_cast %102 : vector<2x8xf32> to vector<2x8x1xf32>
    %104 = tpu.reciprocal %103 {approx = true} : vector<2x8x1xf32> -> vector<2x8x1xf32>
    %105 = vector.broadcast %104 : vector<2x8x1xf32> to vector<2x8x8xf32>
    %106 = arith.mulf %101, %105 : vector<2x8x8xf32>
    %107 = arith.truncf %106 : vector<2x8x8xf32> to vector<2x8x8xbf16>
    %c0_35 = arith.constant 0 : index
    %c3 = arith.constant 3 : index
    %c0_36 = arith.constant 0 : index
    %c0_37 = arith.constant 0 : index
    %108 = vector.load %arg7[%c0_35, %c3, %c0_36, %c0_37] : memref<2x4x8x8xbf16, #tpu.memory_space<vmem>>, vector<2x1x8x8xbf16>
    %109 = vector.shape_cast %108 : vector<2x1x8x8xbf16> to vector<2x8x8xbf16>
    %110 = vector.shape_cast %107 : vector<2x8x8xbf16> to vector<2x1x8x8xbf16>
    tpu.vector_store %arg7[%c0_35, %c3, %c0_36, %c0_37], %110 {strides = array<i32>} : memref<2x4x8x8xbf16, #tpu.memory_space<vmem>>, vector<2x1x8x8xbf16>,
    %111 = arith.truncf %106 : vector<2x8x8xf32> to vector<2x8x8xbf16>
    %cst_38 = arith.constant dense<0.000000e+00> : vector<2x8x8xf32>
    %112 = tpu.matmul %111, %95, %cst_38 {dimension_numbers = #tpu.dot_dimension_numbers<[2], [1], [1], [2], [0, 0, 0, 1, 1, 2], [0], [0]>} : vector<2x8x8xbf16>, vector<2x8x8xbf16>, vector<2x8x8xf32> -> vector<2x8x8xf32>
    %113 = vector.shape_cast %112 : vector<2x8x8xf32> to vector<16x8xf32>
    %114 = arith.truncf %113 : vector<16x8xf32> to vector<16x8xbf16>
    %c0_39 = arith.constant 0 : index
    %c24 = arith.constant 24 : index
    %115 = vector.load %arg8[%c0_39, %c24] : memref<16x32xbf16, #tpu.memory_space<vmem>>, vector<16x8xbf16>
    tpu.vector_store %arg8[%c0_39, %c24], %114 {strides = array<i32>} : memref<16x32xbf16, #tpu.memory_space<vmem>>, vector<16x8xbf16>,
    %c0_40 = arith.constant 0 : index
    %c0_41 = arith.constant 0 : index
    %116 = vector.load %arg8[%c0_40, %c0_41] : memref<16x32xbf16, #tpu.memory_space<vmem>>, vector<16x32xbf16>
    %c0_42 = arith.constant 0 : index
    %c0_43 = arith.constant 0 : index
    %117 = vector.load %arg4[%c0_42, %c0_43] : memref<32x32xbf16, #tpu.memory_space<vmem>>, vector<32x32xbf16>
    %cst_44 = arith.constant dense<0.000000e+00> : vector<16x32xf32>
    %118 = tpu.matmul %116, %117, %cst_44 {dimension_numbers = #tpu.dot_dimension_numbers<[1], [0], [0], [1], [0, 0, 1, 1], [], []>} : vector<16x32xbf16>, vector<32x32xbf16>, vector<16x32xf32> -> vector<16x32xf32>
    %c0_45 = arith.constant 0 : index
    %c0_46 = arith.constant 0 : index
    %119 = vector.load %arg5[%c0_45, %c0_46] : memref<1x32xf32, #tpu.memory_space<vmem>>, vector<1x32xf32>
    %120 = vector.broadcast %119 : vector<1x32xf32> to vector<16x32xf32>
    %121 = arith.addf %118, %120 : vector<16x32xf32>
    %122 = vector.shape_cast %121 : vector<16x32xf32> to vector<2x8x32xf32>
    %c0_47 = arith.constant 0 : index
    %c0_48 = arith.constant 0 : index
    %c0_49 = arith.constant 0 : index
    %123 = vector.load %arg6[%c0_47, %c0_48, %c0_49] : memref<2x8x32xf32, #tpu.memory_space<vmem>>, vector<2x8x32xf32>
    tpu.vector_store %arg6[%c0_47, %c0_48, %c0_49], %122 {strides = array<i32>} : memref<2x8x32xf32, #tpu.memory_space<vmem>>, vector<2x8x32xf32>,
    return
  }
  func.func @transform_0(%arg0: i32) -> (i32, i32, i32) {
    %c0_i32 = arith.constant 0 : i32
    %c0_i32_0 = arith.constant 0 : i32
    %c0_i32_1 = arith.constant 0 : i32
    return %arg0, %c0_i32, %c0_i32_0 : i32, i32, i32
  }
  func.func @transform_1(%arg0: i32) -> (i32, i32) {
    %c0_i32 = arith.constant 0 : i32
    %c0_i32_0 = arith.constant 0 : i32
    %c0_i32_1 = arith.constant 0 : i32
    return %c0_i32, %c0_i32_0 : i32, i32
  }
  func.func @transform_2(%arg0: i32) -> (i32, i32) {
    %c0_i32 = arith.constant 0 : i32
    %c0_i32_0 = arith.constant 0 : i32
    %c0_i32_1 = arith.constant 0 : i32
    return %c0_i32, %c0_i32_0 : i32, i32
  }
  func.func @transform_3(%arg0: i32) -> (i32, i32) {
    %c0_i32 = arith.constant 0 : i32
    %c0_i32_0 = arith.constant 0 : i32
    %c0_i32_1 = arith.constant 0 : i32
    return %c0_i32, %c0_i32_0 : i32, i32
  }
  func.func @transform_4(%arg0: i32) -> (i32, i32) {
    %c0_i32 = arith.constant 0 : i32
    %c0_i32_0 = arith.constant 0 : i32
    %c0_i32_1 = arith.constant 0 : i32
    return %c0_i32, %c0_i32_0 : i32, i32
  }
  func.func @transform_5(%arg0: i32) -> (i32, i32, i32) {
    %c0_i32 = arith.constant 0 : i32
    %c0_i32_0 = arith.constant 0 : i32
    %c0_i32_1 = arith.constant 0 : i32
    return %arg0, %c0_i32, %c0_i32_0 : i32, i32, i32
  }
  func.func @transform_6(%arg0: i32) -> (i32, i32, i32, i32) {
    %c0_i32 = arith.constant 0 : i32
    %c0_i32_0 = arith.constant 0 : i32
    %c0_i32_1 = arith.constant 0 : i32
    %c0_i32_2 = arith.constant 0 : i32
    return %arg0, %c0_i32, %c0_i32_0, %c0_i32_1 : i32, i32, i32, i32
  }
}

</mosaic_0001>

<llo_original>
// kernel: tpu_custom_call.1
$region0: #{tpu_custom_call.1}
  #allocation0 [shape = 'u32[]', space=smem, size = 0x4, offset = 0x4, fixed_abs, tag = 'smem constant byte address 0x4 - core index']
  #allocation1 [shape = 'u32[144,128]{1,0:T(1,128)}', space=vmem, size = 0x12000, scoped, tag = 'internal scratch']
  #allocation2 [shape = 'bf16[16,32]{1,0:T(16,128)(2,1)}', space=vmem, size = 0x1000, scoped, tag = 'scratch operand']
  %s0 = inlined_call_operand.hbm [shape: f32[4,8,32], index: 0, kind: input, shape index: {}]
  %s1 = inlined_call_operand.hbm [shape: bf16[32,96], index: 1, kind: input, shape index: {}]
  %s2 = inlined_call_operand.vmem [shape: f32[1,96], index: 2, kind: input, shape index: {}]
  %s3 = inlined_call_operand.hbm [shape: bf16[32,32], index: 3, kind: input, shape index: {}]
  %s4 = inlined_call_operand.vmem [shape: f32[1,32], index: 4, kind: input, shape index: {}]
  %s5 = inlined_call_operand.hbm [shape: f32[4,8,32], index: 5, kind: output, shape index: {0}]
  %s6 = inlined_call_operand.hbm [shape: bf16[4,4,8,8], index: 6, kind: output, shape index: {1}]
  %7 = xla_tuple %s5, %s6
  %s8 = sld [smem:[#allocation0]]
  $region73: #{tpu_custom_call.1} parent=0
    _
  %s10 = ssub.s32 1, %s8
  %s11 = scalar_select 0, %s10, %s8
  $region1: #{tpu_custom_call.1} parent=0
    #allocation3 [shape = 'u8[16384]{0}', space=vmem, size = 0x4000, scoped, tag = 'input window, operand 0']
    #allocation4 [shape = 's32[2]{0}', space=sflag, size = 0x8, scoped, tag = 'scoped memory for tpu_custom_call.1']
    #allocation5 [shape = 's32[2]{0}', space=sflag, size = 0x8, scoped, tag = 'scoped memory for tpu_custom_call.1']
    #allocation6 [shape = 'u8[8192]{0}', space=vmem, size = 0x2000, scoped, tag = 'input window, operand 1, single buffered']
    #allocation7 [shape = 's32[1]{0}', space=sflag, size = 0x4, scoped, tag = 'scoped memory for tpu_custom_call.1']
    #allocation8 [shape = 'u8[8192]{0}', space=vmem, size = 0x2000, scoped, tag = 'input window, operand 3, single buffered']
    #allocation9 [shape = 'u8[16384]{0}', space=vmem, size = 0x4000, scoped, tag = 'output window, operand 0']
    #allocation10 [shape = 'u8[32768]{0}', space=vmem, size = 0x8000, scoped, tag = 'output window, operand 1']
    #allocation11 [shape = 's32[2]{0}', space=sflag, size = 0x8, scoped, tag = 'scoped memory for tpu_custom_call.1']
    %12 = vsyncpa [#allocation4], 0
    %s13 = scalar_lea.sflag [#allocation4], 1
    %14 = vsyncpa %s13, 0
    %15 = vsyncpa [#allocation7], 0
    %16 = vsyncpa [#allocation5], 0
    %s17 = scalar_lea.sflag [#allocation5], 1
    %18 = vsyncpa %s17, 0
    %19 = vsyncpa [#allocation11], 0
    %s20 = scalar_lea.sflag [#allocation11], 1
    %21 = vsyncpa %s20, 0
    loop: start=0, step=1, limit=4
    $region2: #{tpu_custom_call.1} parent=1 // loop_pre_header
      _
    $region3: #{tpu_custom_call.1} parent=1 // loop_header
      %s23 = sphi 0, %s27
      %p24 = scmp.ge.s32.totalorder %s23, 4
      %s33 = sphi 0, %s35
      %s36 = sphi 0, %s33
      %s37 = sphi 0, %s36
      %s53 = sphi 0, %s37
      %s57 = sphi 0, %s57
      %s59 = sphi 0, %s57
      %s60 = sphi 0, %s59
      %s74 = sphi 0, %s60
      %s78 = sphi 0, %s78
      %s80 = sphi 0, %s78
      %s81 = sphi 0, %s80
      %s95 = sphi 0, %s81
      %s99 = sphi 0, %s99
      %s101 = sphi 0, %s99
      %s102 = sphi 0, %s101
      %s116 = sphi 0, %s102
      %s120 = sphi 0, %s120
      %s122 = sphi 0, %s120
      %s123 = sphi 0, %s122
      %s137 = sphi 0, %s123
      %s143 = sphi 0, %s145
      %s146 = sphi 0, %s143
      %s147 = sphi 0, %s146
      %s163 = sphi 0, %s147
      %s169 = sphi 0, %s171
      %s172 = sphi 0, %s169
      %s173 = sphi 0, %s172
      %s189 = sphi 0, %s173
    $region4: #{tpu_custom_call.1} parent=1 // loop_header_branch
      %26 = sbr.rel (%p24) target = $region8
    $region5: #{tpu_custom_call.1} parent=1 // loop_body
      %s28 = ssub.s32 %s23, 1
      %s29 = ssub.s32 %s23, 2
      %s30 = sadd.s32 %s23, 1
      %s31 = ssub.s32 %s23, %s30
      %p32 = scmp.eq.s32.totalorder %s31, 0
      %s34 = sadd.s32 %s33, 1
      %s35 = scalar_select %p32, %s33, %s34
      %p38 = pneg %p32
      %p39 = scmp.eq.s32.totalorder %s23, 1
      %p40 = por %p38, %p39
      %p41 = scmp.ne.s32.totalorder %s33, %s36
      %p42 = scmp.eq.s32.totalorder %s23, 0
      %p43 = por %p41, %p42
      %p44 = scmp.ne.s32.totalorder %s33, %s36
      %p45 = scmp.eq.s32.totalorder %s28, 1
      %p46 = por %p44, %p45
      %p47 = scmp.ne.s32.totalorder %s36, %s37
      %p48 = scmp.eq.s32.totalorder %s28, 0
      %p49 = por %p47, %p48
      %p50 = scmp.ne.s32.totalorder %s36, %s37
      %p51 = scmp.eq.s32.totalorder %s29, 1
      %p52 = por %p50, %p51
      %p54 = scmp.ne.s32.totalorder %s37, %s53
      %p55 = scmp.eq.s32.totalorder %s29, 0
      %p56 = por %p54, %p55
      %s58 = sadd.s32 %s57, 1
      %p61 = scmp.eq.s32.totalorder %s23, 1
      %p62 = scmp.ne.s32.totalorder %s57, %s59
      %p63 = scmp.eq.s32.totalorder %s23, 0
      %p64 = por %p62, %p63
      %p65 = scmp.ne.s32.totalorder %s57, %s59
      %p66 = scmp.eq.s32.totalorder %s28, 1
      %p67 = por %p65, %p66
      %p68 = scmp.ne.s32.totalorder %s59, %s60
      %p69 = scmp.eq.s32.totalorder %s28, 0
      %p70 = por %p68, %p69
      %p71 = scmp.ne.s32.totalorder %s59, %s60
      %p72 = scmp.eq.s32.totalorder %s29, 1
      %p73 = por %p71, %p72
      %p75 = scmp.ne.s32.totalorder %s60, %s74
      %p76 = scmp.eq.s32.totalorder %s29, 0
      %p77 = por %p75, %p76
      %s79 = sadd.s32 %s78, 1
      %p82 = scmp.eq.s32.totalorder %s23, 1
      %p83 = scmp.ne.s32.totalorder %s78, %s80
      %p84 = scmp.eq.s32.totalorder %s23, 0
      %p85 = por %p83, %p84
      %p86 = scmp.ne.s32.totalorder %s78, %s80
      %p87 = scmp.eq.s32.totalorder %s28, 1
      %p88 = por %p86, %p87
      %p89 = scmp.ne.s32.totalorder %s80, %s81
      %p90 = scmp.eq.s32.totalorder %s28, 0
      %p91 = por %p89, %p90
      %p92 = scmp.ne.s32.totalorder %s80, %s81
      %p93 = scmp.eq.s32.totalorder %s29, 1
      %p94 = por %p92, %p93
      %p96 = scmp.ne.s32.totalorder %s81, %s95
      %p97 = scmp.eq.s32.totalorder %s29, 0
      %p98 = por %p96, %p97
      %s100 = sadd.s32 %s99, 1
      %p103 = scmp.eq.s32.totalorder %s23, 1
      %p104 = scmp.ne.s32.totalorder %s99, %s101
      %p105 = scmp.eq.s32.totalorder %s23, 0
      %p106 = por %p104, %p105
      %p107 = scmp.ne.s32.totalorder %s99, %s101
      %p108 = scmp.eq.s32.totalorder %s28, 1
      %p109 = por %p107, %p108
      %p110 = scmp.ne.s32.totalorder %s101, %s102
      %p111 = scmp.eq.s32.totalorder %s28, 0
      %p112 = por %p110, %p111
      %p113 = scmp.ne.s32.totalorder %s101, %s102
      %p114 = scmp.eq.s32.totalorder %s29, 1
      %p115 = por %p113, %p114
      %p117 = scmp.ne.s32.totalorder %s102, %s116
      %p118 = scmp.eq.s32.totalorder %s29, 0
      %p119 = por %p117, %p118
      %s121 = sadd.s32 %s120, 1
      %p124 = scmp.eq.s32.totalorder %s23, 1
      %p125 = scmp.ne.s32.totalorder %s120, %s122
      %p126 = scmp.eq.s32.totalorder %s23, 0
      %p127 = por %p125, %p126
      %p128 = scmp.ne.s32.totalorder %s120, %s122
      %p129 = scmp.eq.s32.totalorder %s28, 1
      %p130 = por %p128, %p129
      %p131 = scmp.ne.s32.totalorder %s122, %s123
      %p132 = scmp.eq.s32.totalorder %s28, 0
      %p133 = por %p131, %p132
      %p134 = scmp.ne.s32.totalorder %s122, %s123
      %p135 = scmp.eq.s32.totalorder %s29, 1
      %p136 = por %p134, %p135
      %p138 = scmp.ne.s32.totalorder %s123, %s137
      %p139 = scmp.eq.s32.totalorder %s29, 0
      %p140 = por %p138, %p139
      %s141 = ssub.s32 %s23, %s30
      %p142 = scmp.eq.s32.totalorder %s141, 0
      %s144 = sadd.s32 %s143, 1
      %s145 = scalar_select %p142, %s143, %s144
      %p148 = pneg %p142
      %p149 = scmp.eq.s32.totalorder %s23, 1
      %p150 = por %p148, %p149
      %p151 = scmp.ne.s32.totalorder %s143, %s146
      %p152 = scmp.eq.s32.totalorder %s23, 0
      %p153 = por %p151, %p152
      %p154 = scmp.ne.s32.totalorder %s143, %s146
      %p155 = scmp.eq.s32.totalorder %s28, 1
      %p156 = por %p154, %p155
      %p157 = scmp.ne.s32.totalorder %s146, %s147
      %p158 = scmp.eq.s32.totalorder %s28, 0
      %p159 = por %p157, %p158
      %p160 = scmp.ne.s32.totalorder %s146, %s147
      %p161 = scmp.eq.s32.totalorder %s29, 1
      %p162 = por %p160, %p161
      %p164 = scmp.ne.s32.totalorder %s147, %s163
      %p165 = scmp.eq.s32.totalorder %s29, 0
      %p166 = por %p164, %p165
      %s167 = ssub.s32 %s23, %s30
      %p168 = scmp.eq.s32.totalorder %s167, 0
      %s170 = sadd.s32 %s169, 1
      %s171 = scalar_select %p168, %s169, %s170
      %p174 = pneg %p168
      %p175 = scmp.eq.s32.totalorder %s23, 1
      %p176 = por %p174, %p175
      %p177 = scmp.ne.s32.totalorder %s169, %s172
      %p178 = scmp.eq.s32.totalorder %s23, 0
      %p179 = por %p177, %p178
      %p180 = scmp.ne.s32.totalorder %s169, %s172
      %p181 = scmp.eq.s32.totalorder %s28, 1
      %p182 = por %p180, %p181
      %p183 = scmp.ne.s32.totalorder %s172, %s173
      %p184 = scmp.eq.s32.totalorder %s28, 0
      %p185 = por %p183, %p184
      %p186 = scmp.ne.s32.totalorder %s172, %s173
      %p187 = scmp.eq.s32.totalorder %s29, 1
      %p188 = por %p186, %p187
      %p190 = scmp.ne.s32.totalorder %s173, %s189
      %p191 = scmp.eq.s32.totalorder %s29, 0
      %p192 = por %p190, %p191
      %p193 = scmp.le.s32.totalorder 1, %s23
      %p194 = scmp.lt.s32.totalorder %s23, 3
      %p195 = pnand %p193, %p194
      %p196 = pneg %p195
      // Predicated region
      $region9: #{tpu_custom_call.1} parent=5 // pred_check
        _
      $region10: #{tpu_custom_call.1} parent=5 // pred_check_branch
        %198 = sbr.rel (%p195) target = $region12
      $region11: #{tpu_custom_call.1} parent=5 // pred_region
        %s199 = ssub.s32 %s23, 1
        // Predicated region
        $region13: #{tpu_custom_call.1} parent=11 // pred_check
          %p200 = pneg %p70
        $region14: #{tpu_custom_call.1} parent=11 // pred_check_branch
          %202 = sbr.rel (%p200) target = $region16
        $region15: #{tpu_custom_call.1} parent=11 // pred_region
          %s204 = ssub.s32 256, 256
          %205 = vsyncadd [#allocation7], %s204
          %s206 = sshll.u32 [#allocation6], 4
          %s207 = int_to_ptr.vmem [resolvable:$true] %s206
          %212 = dma.hbm_to_vmem [thread:$0]  %s1, 256, %s207, [#allocation7], 64, 64, 4
        $region16: #{tpu_custom_call.1} parent=11 // pred_fallthru
          _
        // Predicated region
        $region17: #{tpu_custom_call.1} parent=11 // pred_check
          %p213 = pneg %p91
        $region18: #{tpu_custom_call.1} parent=11 // pred_check_branch
          %215 = sbr.rel (%p213) target = $region20
        $region19: #{tpu_custom_call.1} parent=11 // pred_region
          _
        $region20: #{tpu_custom_call.1} parent=11 // pred_fallthru
          _
        // Predicated region
        $region21: #{tpu_custom_call.1} parent=11 // pred_check
          %p216 = pneg %p112
        $region22: #{tpu_custom_call.1} parent=11 // pred_check_branch
          %218 = sbr.rel (%p216) target = $region24
        $region23: #{tpu_custom_call.1} parent=11 // pred_region
          %s220 = ssub.s32 256, 256
          %221 = vsyncadd [#allocation7], %s220
          %s222 = sshll.u32 [#allocation8], 4
          %s223 = int_to_ptr.vmem [resolvable:$true] %s222
          %228 = dma.hbm_to_vmem [thread:$0]  %s3, 256, %s223, [#allocation7], 64, 64, 4
        $region24: #{tpu_custom_call.1} parent=11 // pred_fallthru
          _
        // Predicated region
        $region25: #{tpu_custom_call.1} parent=11 // pred_check
          %p229 = pneg %p133
        $region26: #{tpu_custom_call.1} parent=11 // pred_check_branch
          %231 = sbr.rel (%p229) target = $region28
        $region27: #{tpu_custom_call.1} parent=11 // pred_region
          _
        $region28: #{tpu_custom_call.1} parent=11 // pred_fallthru
          _
      $region12: #{tpu_custom_call.1} parent=5 // pred_fallthru
        _
      %p232 = scmp.lt.s32.totalorder %s23, 2
      // Predicated region
      $region29: #{tpu_custom_call.1} parent=5 // pred_check
        %p233 = pneg %p232
      $region30: #{tpu_custom_call.1} parent=5 // pred_check_branch
        %235 = sbr.rel (%p233) target = $region32
      $region31: #{tpu_custom_call.1} parent=5 // pred_region
        // Predicated region
        $region33: #{tpu_custom_call.1} parent=31 // pred_check
          %p236 = pneg %p43
        $region34: #{tpu_custom_call.1} parent=31 // pred_check_branch
          %238 = sbr.rel (%p236) target = $region36
        $region35: #{tpu_custom_call.1} parent=31 // pred_region
          %s239 = sand.u32 %s33, 1
          %s240 = scalar_lea.sflag [#allocation4], %s239
          %s241 = sand.u32 %s33, 1
          %s242 = smul.addr %s241, 16
          %s243 = scalar_lea.vmem [#allocation3], %s242
          %s244 = smul.u32 2, %s23
          %s246 = ssub.s32 256, 256
          %247 = vsyncadd %s240, %s246
          %s248 = smul.addr %s244, 128
          %s249 = scalar_lea.hbm %s0, %s248
          %s250 = sshll.u32 %s243, 4
          %s251 = int_to_ptr.vmem [resolvable:$true] %s250
          %256 = dma.hbm_to_vmem [thread:$0]  %s249, 256, %s251, %s240, 128, 128, 8
        $region36: #{tpu_custom_call.1} parent=31 // pred_fallthru
          _
      $region32: #{tpu_custom_call.1} parent=5 // pred_fallthru
        _
      %p257 = scmp.le.s32.totalorder 1, %s23
      %p258 = scmp.lt.s32.totalorder %s23, 3
      %p259 = pnand %p257, %p258
      %p260 = pneg %p259
      // Predicated region
      $region37: #{tpu_custom_call.1} parent=5 // pred_check
        _
      $region38: #{tpu_custom_call.1} parent=5 // pred_check_branch
        %262 = sbr.rel (%p259) target = $region40
      $region39: #{tpu_custom_call.1} parent=5 // pred_region
        %s263 = ssub.s32 %s23, 1
        %s264 = sand.u32 %s36, 1
        %s265 = scalar_lea.sflag [#allocation4], %s264
        %s266 = sand.u32 %s36, 1
        %s267 = smul.addr %s266, 16
        %s268 = scalar_lea.vmem [#allocation3], %s267
        // Predicated region
        $region41: #{tpu_custom_call.1} parent=39 // pred_check
          %p269 = pneg %p49
        $region42: #{tpu_custom_call.1} parent=39 // pred_check_branch
          %271 = sbr.rel (%p269) target = $region44
        $region43: #{tpu_custom_call.1} parent=39 // pred_region
          %272 = dma.done %s265, 256
        $region44: #{tpu_custom_call.1} parent=39 // pred_fallthru
          _
        // Predicated region
        $region45: #{tpu_custom_call.1} parent=39 // pred_check
          %p273 = pneg %p70
        $region46: #{tpu_custom_call.1} parent=39 // pred_check_branch
          %275 = sbr.rel (%p273) target = $region48
        $region47: #{tpu_custom_call.1} parent=39 // pred_region
          %276 = dma.done [#allocation7], 256
        $region48: #{tpu_custom_call.1} parent=39 // pred_fallthru
          _
        // Predicated region
        $region49: #{tpu_custom_call.1} parent=39 // pred_check
          %p277 = pneg %p112
        $region50: #{tpu_custom_call.1} parent=39 // pred_check_branch
          %279 = sbr.rel (%p277) target = $region52
        $region51: #{tpu_custom_call.1} parent=39 // pred_region
          %280 = dma.done [#allocation7], 256
        $region52: #{tpu_custom_call.1} parent=39 // pred_fallthru
          _
        %s281 = sand.u32 %s36, 1
        %s282 = scalar_lea.sflag [#allocation4], %s281
        %s283 = sand.u32 %s36, 1
        %s284 = smul.addr %s283, 16
        %s285 = scalar_lea.vmem [#allocation3], %s284
        %p286 = pneg %p49
        %p287 = pneg %p46
        %p288 = pneg %p70
        %p289 = pneg %p67
        %p290 = pneg %p91
        %p291 = pneg %p88
        %p292 = pneg %p112
        %p293 = pneg %p109
        %p294 = pneg %p133
        %p295 = pneg %p130
        %p296 = pneg %p159
        %p297 = pneg %p156
        %s298 = sand.u32 %s146, 1
        %s299 = scalar_lea.sflag [#allocation5], %s298
        %s300 = sand.u32 %s146, 1
        %s301 = smul.addr %s300, 16
        %s302 = scalar_lea.vmem [#allocation9], %s301
        %p303 = pneg %p185
        %p304 = pneg %p182
        %s305 = sand.u32 %s172, 1
        %s306 = scalar_lea.sflag [#allocation11], %s305
        %s307 = sand.u32 %s172, 1
        %s308 = smul.addr %s307, 32
        %s309 = scalar_lea.vmem [#allocation10], %s308
        %s310 = smul.u32 2, %s28
        %s311 = smul.u32 2, %s28
        %s312 = smul.u32 2, %s28
        %v314 = vld [vmem:[%s268] sm:$0xff]
        %v315 = vld [vmem:[%s268 + $0x8] sm:$0xff]
        %v316 = vpack.c.bf16 %v315, %v314
        %v317 = vld [vmem:[#allocation6] sm:$0xf]
        %v318 = vld [vmem:[#allocation6 + $0x4] sm:$0xf]
        %v319 = vld [vmem:[#allocation6 + $0x8] sm:$0xf]
        %v320 = vld [vmem:[#allocation6 + $0xc] sm:$0xf]
        %v321 = vld [vmem:[%s2] sm:$0x1]
        %v323 = vlaneseq
        %v324 = vshrl.u32 %v323, 7
        %v325 = vsub.s32 0, %v324
        %v326 = vrot.slane %v321, %v325
        %v332 = vunpack.c.l.b16 %v317
        %v333 = vunpack.c.l.b16 %v318
        %v334 = vunpack.c.l.b16 %v319
        %v335 = vunpack.c.l.b16 %v320
        %v336 = vpack.c.b16 %v333, %v332
        %v337 = vpack.c.b16 %v335, %v334
        %vm340 = vcmask 261120
        %v342 = vsel %vm340, %v316, 0
        %344 = vmatprep.subr.bf16.mxu0 0
        %345 = vmatpush1.bf16.msra.mxu0 %v336
        %346 = vmatprep.subr.bf16.mxu0 0
        %347 = vmatpush1.bf16.msra.mxu0 %v337
        %348 = vmatprep.subr.bf16.mxu0 0
        %349 = vmatpush1.bf16.msra.mxu0 0
        %350 = vmatprep.subr.bf16.mxu0 0
        %351 = vmatpush1.bf16.msra.mxu0 0
        %352 = vmatprep.subr.bf16.mxu0 0
        %353 = vmatpush1.bf16.msra.mxu0 0
        %354 = vmatprep.subr.bf16.mxu0 0
        %355 = vmatpush1.bf16.msra.mxu0 0
        %356 = vmatprep.subr.bf16.mxu0 0
        %357 = vmatpush1.bf16.msra.mxu0 0
        %358 = vmatprep.subr.bf16.mxu0 0
        %359 = vmatpush1.bf16.msra.mxu0 0
        %360 = vmatprep.subr.bf16.mxu0 0
        %361 = vmatpush1.bf16.msra.mxu0 0
        %362 = vmatprep.subr.bf16.mxu0 0
        %363 = vmatpush1.bf16.msra.mxu0 0
        %364 = vmatprep.subr.bf16.mxu0 0
        %365 = vmatpush1.bf16.msra.mxu0 0
        %366 = vmatprep.subr.bf16.mxu0 0
        %367 = vmatpush1.bf16.msra.mxu0 0
        %368 = vmatprep.subr.bf16.mxu0 0
        %369 = vmatpush1.bf16.msra.mxu0 0
        %370 = vmatprep.subr.bf16.mxu0 0
        %371 = vmatpush1.bf16.msra.mxu0 0
        %372 = vmatprep.subr.bf16.mxu0 0
        %373 = vmatpush1.bf16.msra.mxu0 0
        %374 = vmatprep.subr.bf16.mxu0 0
        %375 = vmatpush1.bf16.msra.mxu0 0
        %376 = vmatprep.mubr.bf16.mxu0 0
        %377 = vmatmul.mubr.bf16.gmra.mrb[0].mxu0 %v342
        %v378 = vpop.f32.mrb[0].mxu0
        %v379 = vadd.f32 %v326, %v378
        %v380 = vpop.f32.mrb[0].mxu0
        %v381 = vpop.f32.mrb[0].mxu0
        %v382 = vadd.f32 %v326, %v381
        %v383 = vpop.f32.mrb[0].mxu0
        %384 = vdwg.mxu0
        %v385 = vpack.c.bf16 %v382, %v379
        %v387 = vunpack.c.l.b16 %v385
        %v388 = vunpack.c.h.b16 %v385
        %v389 = vpack.c.b16 %v387, %v387
        %v390 = vpack.c.b16 %v388, %v388
        %391 = vrot.lane.b32.xlu0 %v389, 96
        %v392 = vpop.permute.xlu0 %391
        %vm393 = vcmask 64512
        %v395 = vsel %vm393, %v389, 0
        %v398 = vsel %vm393, %v392, 0
        %400 = vmatprep.subr.bf16.mxu0 0
        %401 = vmatpush1.bf16.xpose.msra.mxu0 %v398
        %402 = vmatprep.subr.bf16.mxu0 0
        %403 = vmatpush1.bf16.xpose.msra.mxu0 0
        %404 = vmatprep.subr.bf16.mxu0 0
        %405 = vmatpush1.bf16.xpose.msra.mxu0 0
        %406 = vmatprep.subr.bf16.mxu0 0
        %407 = vmatpush1.bf16.xpose.msra.mxu0 0
        %408 = vmatprep.subr.bf16.mxu0 0
        %409 = vmatpush1.bf16.xpose.msra.mxu0 0
        %410 = vmatprep.subr.bf16.mxu0 0
        %411 = vmatpush1.bf16.xpose.msra.mxu0 0
        %412 = vmatprep.subr.bf16.mxu0 0
        %413 = vmatpush1.bf16.xpose.msra.mxu0 0
        %414 = vmatprep.subr.bf16.mxu0 0
        %415 = vmatpush1.bf16.xpose.msra.mxu0 0
        %416 = vmatprep.subr.bf16.mxu0 0
        %417 = vmatpush1.bf16.xpose.msra.mxu0 0
        %418 = vmatprep.subr.bf16.mxu0 0
        %419 = vmatpush1.bf16.xpose.msra.mxu0 0
        %420 = vmatprep.subr.bf16.mxu0 0
        %421 = vmatpush1.bf16.xpose.msra.mxu0 0
        %422 = vmatprep.subr.bf16.mxu0 0
        %423 = vmatpush1.bf16.xpose.msra.mxu0 0
        %424 = vmatprep.subr.bf16.mxu0 0
        %425 = vmatpush1.bf16.xpose.msra.mxu0 0
        %426 = vmatprep.subr.bf16.mxu0 0
        %427 = vmatpush1.bf16.xpose.msra.mxu0 0
        %428 = vmatprep.subr.bf16.mxu0 0
        %429 = vmatpush1.bf16.xpose.msra.mxu0 0
        %430 = vmatprep.subr.bf16.mxu0 0
        %431 = vmatpush1.bf16.xpose.msra.mxu0 0
        %432 = vmatprep.mubr.bf16.mxu0 0
        %433 = vmatmul.mubr.bf16.gmra.mrb[0].mxu0 %v395
        %v434 = vpop.f32.mrb[0].mxu0
        %v435 = vadd.f32 0.0, %v434
        %v436 = vpop.f32.mrb[0].mxu0
        %v437 = vpop.f32.mrb[0].mxu0
        %v438 = vpop.f32.mrb[0].mxu0
        %439 = vdwg.mxu0
        %440 = vrot.lane.b32.xlu0 %v390, 96
        %v441 = vpop.permute.xlu0 %440
        %v443 = vsel %vm393, %v390, 0
        %v446 = vsel %vm393, %v441, 0
        %448 = vmatprep.subr.bf16.mxu0 0
        %449 = vmatpush1.bf16.xpose.msra.mxu0 %v446
        %450 = vmatprep.subr.bf16.mxu0 0
        %451 = vmatpush1.bf16.xpose.msra.mxu0 0
        %452 = vmatprep.subr.bf16.mxu0 0
        %453 = vmatpush1.bf16.xpose.msra.mxu0 0
        %454 = vmatprep.subr.bf16.mxu0 0
        %455 = vmatpush1.bf16.xpose.msra.mxu0 0
        %456 = vmatprep.subr.bf16.mxu0 0
        %457 = vmatpush1.bf16.xpose.msra.mxu0 0
        %458 = vmatprep.subr.bf16.mxu0 0
        %459 = vmatpush1.bf16.xpose.msra.mxu0 0
        %460 = vmatprep.subr.bf16.mxu0 0
        %461 = vmatpush1.bf16.xpose.msra.mxu0 0
        %462 = vmatprep.subr.bf16.mxu0 0
        %463 = vmatpush1.bf16.xpose.msra.mxu0 0
        %464 = vmatprep.subr.bf16.mxu0 0
        %465 = vmatpush1.bf16.xpose.msra.mxu0 0
        %466 = vmatprep.subr.bf16.mxu0 0
        %467 = vmatpush1.bf16.xpose.msra.mxu0 0
        %468 = vmatprep.subr.bf16.mxu0 0
        %469 = vmatpush1.bf16.xpose.msra.mxu0 0
        %470 = vmatprep.subr.bf16.mxu0 0
        %471 = vmatpush1.bf16.xpose.msra.mxu0 0
        %472 = vmatprep.subr.bf16.mxu0 0
        %473 = vmatpush1.bf16.xpose.msra.mxu0 0
        %474 = vmatprep.subr.bf16.mxu0 0
        %475 = vmatpush1.bf16.xpose.msra.mxu0 0
        %476 = vmatprep.subr.bf16.mxu0 0
        %477 = vmatpush1.bf16.xpose.msra.mxu0 0
        %478 = vmatprep.subr.bf16.mxu0 0
        %479 = vmatpush1.bf16.xpose.msra.mxu0 0
        %480 = vmatprep.mubr.bf16.mxu0 0
        %481 = vmatmul.mubr.bf16.gmra.mrb[0].mxu0 %v443
        %v482 = vpop.f32.mrb[0].mxu0
        %v483 = vadd.f32 0.0, %v482
        %v484 = vpop.f32.mrb[0].mxu0
        %v485 = vpop.f32.mrb[0].mxu0
        %v486 = vpop.f32.mrb[0].mxu0
        %487 = vdwg.mxu0
        %v488 = vsel %vm393, %v435, -inf
        %489 = vmax.xlane.f32.xlu0 %v488
        %v490 = vpop.xlane.xlu0 %489
        %v491 = vsel %vm393, %v483, -inf
        %492 = vmax.xlane.f32.xlu0 %v491
        %v493 = vpop.xlane.xlu0 %492
        %v494 = vsub.f32 %v435, %v490
        %v495 = vsub.f32 %v483, %v493
        %v496 = vmul.f32 %v494, 1.442695
        %v497 = vpow.pop %v496
        %v498 = vmul.f32 %v495, 1.442695
        %v499 = vpow.pop %v498
        %v500 = vsel %vm393, %v497, 0.0
        %501 = vadd.xlane.f32.xlu0 %v500
        %v502 = vpop.xlane.xlu0 %501
        %v503 = vsel %vm393, %v499, 0.0
        %504 = vadd.xlane.f32.xlu0 %v503
        %v505 = vpop.xlane.xlu0 %504
        %v506 = vrcp.pop %v502
        %v507 = vrcp.pop %v505
        %v508 = vmul.f32 %v497, %v506
        %v509 = vmul.f32 %v499, %v507
        %v510 = vpack.c.bf16 %v508, %v508
        %v511 = vpack.c.bf16 %v509, %v509
        %vm512 = vcmask 60416
        %513 = vst.msk [vmem:[%s309] sm:$0xf] %vm512, %v510
        %514 = vst.msk [vmem:[%s309 + $0x10] sm:$0xf] %vm512, %v511
        %515 = vrot.lane.b32.xlu0 %v389, 64
        %v516 = vpop.permute.xlu0 %515
        %v518 = vsel %vm393, %v510, 0
        %vm520 = vcmask 1043456
        %v522 = vsel %vm520, %v516, 0
        %524 = vmatprep.subr.bf16.mxu0 0
        %525 = vmatpush1.bf16.msra.mxu0 %v522
        %526 = vmatprep.subr.bf16.mxu0 0
        %527 = vmatpush1.bf16.msra.mxu0 0
        %528 = vmatprep.subr.bf16.mxu0 0
        %529 = vmatpush1.bf16.msra.mxu0 0
        %530 = vmatprep.subr.bf16.mxu0 0
        %531 = vmatpush1.bf16.msra.mxu0 0
        %532 = vmatprep.subr.bf16.mxu0 0
        %533 = vmatpush1.bf16.msra.mxu0 0
        %534 = vmatprep.subr.bf16.mxu0 0
        %535 = vmatpush1.bf16.msra.mxu0 0
        %536 = vmatprep.subr.bf16.mxu0 0
        %537 = vmatpush1.bf16.msra.mxu0 0
        %538 = vmatprep.subr.bf16.mxu0 0
        %539 = vmatpush1.bf16.msra.mxu0 0
        %540 = vmatprep.subr.bf16.mxu0 0
        %541 = vmatpush1.bf16.msra.mxu0 0
        %542 = vmatprep.subr.bf16.mxu0 0
        %543 = vmatpush1.bf16.msra.mxu0 0
        %544 = vmatprep.subr.bf16.mxu0 0
        %545 = vmatpush1.bf16.msra.mxu0 0
        %546 = vmatprep.subr.bf16.mxu0 0
        %547 = vmatpush1.bf16.msra.mxu0 0
        %548 = vmatprep.subr.bf16.mxu0 0
        %549 = vmatpush1.bf16.msra.mxu0 0
        %550 = vmatprep.subr.bf16.mxu0 0
        %551 = vmatpush1.bf16.msra.mxu0 0
        %552 = vmatprep.subr.bf16.mxu0 0
        %553 = vmatpush1.bf16.msra.mxu0 0
        %554 = vmatprep.subr.bf16.mxu0 0
        %555 = vmatpush1.bf16.msra.mxu0 0
        %556 = vmatprep.mubr.bf16.mxu0 0
        %557 = vmatmul.mubr.bf16.gmra.mrb[0].mxu0 %v518
        %v558 = vpop.f32.mrb[0].mxu0
        %v559 = vadd.f32 0.0, %v558
        %v560 = vpop.f32.mrb[0].mxu0
        %v561 = vpop.f32.mrb[0].mxu0
        %v562 = vpop.f32.mrb[0].mxu0
        %563 = vdwg.mxu0
        %564 = vrot.lane.b32.xlu0 %v390, 64
        %v565 = vpop.permute.xlu0 %564
        %v567 = vsel %vm393, %v511, 0
        %v570 = vsel %vm520, %v565, 0
        %572 = vmatprep.subr.bf16.mxu0 0
        %573 = vmatpush1.bf16.msra.mxu0 %v570
        %574 = vmatprep.subr.bf16.mxu0 0
        %575 = vmatpush1.bf16.msra.mxu0 0
        %576 = vmatprep.subr.bf16.mxu0 0
        %577 = vmatpush1.bf16.msra.mxu0 0
        %578 = vmatprep.subr.bf16.mxu0 0
        %579 = vmatpush1.bf16.msra.mxu0 0
        %580 = vmatprep.subr.bf16.mxu0 0
        %581 = vmatpush1.bf16.msra.mxu0 0
        %582 = vmatprep.subr.bf16.mxu0 0
        %583 = vmatpush1.bf16.msra.mxu0 0
        %584 = vmatprep.subr.bf16.mxu0 0
        %585 = vmatpush1.bf16.msra.mxu0 0
        %586 = vmatprep.subr.bf16.mxu0 0
        %587 = vmatpush1.bf16.msra.mxu0 0
        %588 = vmatprep.subr.bf16.mxu0 0
        %589 = vmatpush1.bf16.msra.mxu0 0
        %590 = vmatprep.subr.bf16.mxu0 0
        %591 = vmatpush1.bf16.msra.mxu0 0
        %592 = vmatprep.subr.bf16.mxu0 0
        %593 = vmatpush1.bf16.msra.mxu0 0
        %594 = vmatprep.subr.bf16.mxu0 0
        %595 = vmatpush1.bf16.msra.mxu0 0
        %596 = vmatprep.subr.bf16.mxu0 0
        %597 = vmatpush1.bf16.msra.mxu0 0
        %598 = vmatprep.subr.bf16.mxu0 0
        %599 = vmatpush1.bf16.msra.mxu0 0
        %600 = vmatprep.subr.bf16.mxu0 0
        %601 = vmatpush1.bf16.msra.mxu0 0
        %602 = vmatprep.subr.bf16.mxu0 0
        %603 = vmatpush1.bf16.msra.mxu0 0
        %604 = vmatprep.mubr.bf16.mxu0 0
        %605 = vmatmul.mubr.bf16.gmra.mrb[0].mxu0 %v567
        %v606 = vpop.f32.mrb[0].mxu0
        %v607 = vadd.f32 0.0, %v606
        %v608 = vpop.f32.mrb[0].mxu0
        %v609 = vpop.f32.mrb[0].mxu0
        %v610 = vpop.f32.mrb[0].mxu0
        %611 = vdwg.mxu0
        %v612 = vpack.c.bf16 %v607, %v559
        %613 = vst.msk [vmem:[#allocation2] sm:$0xff] %vm393, %v612
        %614 = vrot.lane.b32.xlu0 %v389, 120
        %v615 = vpop.permute.xlu0 %614
        %616 = vrot.lane.b32.xlu0 %v389, 88
        %v617 = vpop.permute.xlu0 %616
        %v619 = vsel %vm393, %v615, 0
        %v622 = vsel %vm393, %v617, 0
        %624 = vmatprep.subr.bf16.mxu0 0
        %625 = vmatpush1.bf16.xpose.msra.mxu0 %v622
        %626 = vmatprep.subr.bf16.mxu0 0
        %627 = vmatpush1.bf16.xpose.msra.mxu0 0
        %628 = vmatprep.subr.bf16.mxu0 0
        %629 = vmatpush1.bf16.xpose.msra.mxu0 0
        %630 = vmatprep.subr.bf16.mxu0 0
        %631 = vmatpush1.bf16.xpose.msra.mxu0 0
        %632 = vmatprep.subr.bf16.mxu0 0
        %633 = vmatpush1.bf16.xpose.msra.mxu0 0
        %634 = vmatprep.subr.bf16.mxu0 0
        %635 = vmatpush1.bf16.xpose.msra.mxu0 0
        %636 = vmatprep.subr.bf16.mxu0 0
        %637 = vmatpush1.bf16.xpose.msra.mxu0 0
        %638 = vmatprep.subr.bf16.mxu0 0
        %639 = vmatpush1.bf16.xpose.msra.mxu0 0
        %640 = vmatprep.subr.bf16.mxu0 0
        %641 = vmatpush1.bf16.xpose.msra.mxu0 0
        %642 = vmatprep.subr.bf16.mxu0 0
        %643 = vmatpush1.bf16.xpose.msra.mxu0 0
        %644 = vmatprep.subr.bf16.mxu0 0
        %645 = vmatpush1.bf16.xpose.msra.mxu0 0
        %646 = vmatprep.subr.bf16.mxu0 0
        %647 = vmatpush1.bf16.xpose.msra.mxu0 0
        %648 = vmatprep.subr.bf16.mxu0 0
        %649 = vmatpush1.bf16.xpose.msra.mxu0 0
        %650 = vmatprep.subr.bf16.mxu0 0
        %651 = vmatpush1.bf16.xpose.msra.mxu0 0
        %652 = vmatprep.subr.bf16.mxu0 0
        %653 = vmatpush1.bf16.xpose.msra.mxu0 0
        %654 = vmatprep.subr.bf16.mxu0 0
        %655 = vmatpush1.bf16.xpose.msra.mxu0 0
        %656 = vmatprep.mubr.bf16.mxu0 0
        %657 = vmatmul.mubr.bf16.gmra.mrb[0].mxu0 %v619
        %v658 = vpop.f32.mrb[0].mxu0
        %v659 = vadd.f32 0.0, %v658
        %v660 = vpop.f32.mrb[0].mxu0
        %v661 = vpop.f32.mrb[0].mxu0
        %v662 = vpop.f32.mrb[0].mxu0
        %663 = vdwg.mxu0
        %664 = vrot.lane.b32.xlu0 %v390, 120
        %v665 = vpop.permute.xlu0 %664
        %666 = vrot.lane.b32.xlu0 %v390, 88
        %v667 = vpop.permute.xlu0 %666
        %v669 = vsel %vm393, %v665, 0
        %v672 = vsel %vm393, %v667, 0
        %674 = vmatprep.subr.bf16.mxu0 0
        %675 = vmatpush1.bf16.xpose.msra.mxu0 %v672
        %676 = vmatprep.subr.bf16.mxu0 0
        %677 = vmatpush1.bf16.xpose.msra.mxu0 0
        %678 = vmatprep.subr.bf16.mxu0 0
        %679 = vmatpush1.bf16.xpose.msra.mxu0 0
        %680 = vmatprep.subr.bf16.mxu0 0
        %681 = vmatpush1.bf16.xpose.msra.mxu0 0
        %682 = vmatprep.subr.bf16.mxu0 0
        %683 = vmatpush1.bf16.xpose.msra.mxu0 0
        %684 = vmatprep.subr.bf16.mxu0 0
        %685 = vmatpush1.bf16.xpose.msra.mxu0 0
        %686 = vmatprep.subr.bf16.mxu0 0
        %687 = vmatpush1.bf16.xpose.msra.mxu0 0
        %688 = vmatprep.subr.bf16.mxu0 0
        %689 = vmatpush1.bf16.xpose.msra.mxu0 0
        %690 = vmatprep.subr.bf16.mxu0 0
        %691 = vmatpush1.bf16.xpose.msra.mxu0 0
        %692 = vmatprep.subr.bf16.mxu0 0
        %693 = vmatpush1.bf16.xpose.msra.mxu0 0
        %694 = vmatprep.subr.bf16.mxu0 0
        %695 = vmatpush1.bf16.xpose.msra.mxu0 0
        %696 = vmatprep.subr.bf16.mxu0 0
        %697 = vmatpush1.bf16.xpose.msra.mxu0 0
        %698 = vmatprep.subr.bf16.mxu0 0
        %699 = vmatpush1.bf16.xpose.msra.mxu0 0
        %700 = vmatprep.subr.bf16.mxu0 0
        %701 = vmatpush1.bf16.xpose.msra.mxu0 0
        %702 = vmatprep.subr.bf16.mxu0 0
        %703 = vmatpush1.bf16.xpose.msra.mxu0 0
        %704 = vmatprep.subr.bf16.mxu0 0
        %705 = vmatpush1.bf16.xpose.msra.mxu0 0
        %706 = vmatprep.mubr.bf16.mxu0 0
        %707 = vmatmul.mubr.bf16.gmra.mrb[0].mxu0 %v669
        %v708 = vpop.f32.mrb[0].mxu0
        %v709 = vadd.f32 0.0, %v708
        %v710 = vpop.f32.mrb[0].mxu0
        %v711 = vpop.f32.mrb[0].mxu0
        %v712 = vpop.f32.mrb[0].mxu0
        %713 = vdwg.mxu0
        %v714 = vsel %vm393, %v659, -inf
        %715 = vmax.xlane.f32.xlu0 %v714
        %v716 = vpop.xlane.xlu0 %715
        %v717 = vsel %vm393, %v709, -inf
        %718 = vmax.xlane.f32.xlu0 %v717
        %v719 = vpop.xlane.xlu0 %718
        %v720 = vsub.f32 %v659, %v716
        %v721 = vsub.f32 %v709, %v719
        %v722 = vmul.f32 %v720, 1.442695
        %v723 = vpow.pop %v722
        %v724 = vmul.f32 %v721, 1.442695
        %v725 = vpow.pop %v724
        %v726 = vsel %vm393, %v723, 0.0
        %727 = vadd.xlane.f32.xlu0 %v726
        %v728 = vpop.xlane.xlu0 %727
        %v729 = vsel %vm393, %v725, 0.0
        %730 = vadd.xlane.f32.xlu0 %v729
        %v731 = vpop.xlane.xlu0 %730
        %v732 = vrcp.pop %v728
        %v733 = vrcp.pop %v731
        %v734 = vmul.f32 %v723, %v732
        %v735 = vmul.f32 %v725, %v733
        %v736 = vpack.c.bf16 %v734, %v734
        %v737 = vpack.c.bf16 %v735, %v735
        %s738 = scalar_lea.vmem %s309, 4 [#allocation10]
        %739 = vst.msk [vmem:[%s738] sm:$0xf] %vm512, %v736
        %740 = vst.msk [vmem:[%s738 + $0x10] sm:$0xf] %vm512, %v737
        %741 = vrot.lane.b32.xlu0 %v389, 56
        %v742 = vpop.permute.xlu0 %741
        %v744 = vsel %vm393, %v736, 0
        %v747 = vsel %vm520, %v742, 0
        %749 = vmatprep.subr.bf16.mxu0 0
        %750 = vmatpush1.bf16.msra.mxu0 %v747
        %751 = vmatprep.subr.bf16.mxu0 0
        %752 = vmatpush1.bf16.msra.mxu0 0
        %753 = vmatprep.subr.bf16.mxu0 0
        %754 = vmatpush1.bf16.msra.mxu0 0
        %755 = vmatprep.subr.bf16.mxu0 0
        %756 = vmatpush1.bf16.msra.mxu0 0
        %757 = vmatprep.subr.bf16.mxu0 0
        %758 = vmatpush1.bf16.msra.mxu0 0
        %759 = vmatprep.subr.bf16.mxu0 0
        %760 = vmatpush1.bf16.msra.mxu0 0
        %761 = vmatprep.subr.bf16.mxu0 0
        %762 = vmatpush1.bf16.msra.mxu0 0
        %763 = vmatprep.subr.bf16.mxu0 0
        %764 = vmatpush1.bf16.msra.mxu0 0
        %765 = vmatprep.subr.bf16.mxu0 0
        %766 = vmatpush1.bf16.msra.mxu0 0
        %767 = vmatprep.subr.bf16.mxu0 0
        %768 = vmatpush1.bf16.msra.mxu0 0
        %769 = vmatprep.subr.bf16.mxu0 0
        %770 = vmatpush1.bf16.msra.mxu0 0
        %771 = vmatprep.subr.bf16.mxu0 0
        %772 = vmatpush1.bf16.msra.mxu0 0
        %773 = vmatprep.subr.bf16.mxu0 0
        %774 = vmatpush1.bf16.msra.mxu0 0
        %775 = vmatprep.subr.bf16.mxu0 0
        %776 = vmatpush1.bf16.msra.mxu0 0
        %777 = vmatprep.subr.bf16.mxu0 0
        %778 = vmatpush1.bf16.msra.mxu0 0
        %779 = vmatprep.subr.bf16.mxu0 0
        %780 = vmatpush1.bf16.msra.mxu0 0
        %781 = vmatprep.mubr.bf16.mxu0 0
        %782 = vmatmul.mubr.bf16.gmra.mrb[0].mxu0 %v744
        %v783 = vpop.f32.mrb[0].mxu0
        %v784 = vadd.f32 0.0, %v783
        %v785 = vpop.f32.mrb[0].mxu0
        %v786 = vpop.f32.mrb[0].mxu0
        %v787 = vpop.f32.mrb[0].mxu0
        %788 = vdwg.mxu0
        %789 = vrot.lane.b32.xlu0 %v390, 56
        %v790 = vpop.permute.xlu0 %789
        %v792 = vsel %vm393, %v737, 0
        %v795 = vsel %vm520, %v790, 0
        %797 = vmatprep.subr.bf16.mxu0 0
        %798 = vmatpush1.bf16.msra.mxu0 %v795
        %799 = vmatprep.subr.bf16.mxu0 0
        %800 = vmatpush1.bf16.msra.mxu0 0
        %801 = vmatprep.subr.bf16.mxu0 0
        %802 = vmatpush1.bf16.msra.mxu0 0
        %803 = vmatprep.subr.bf16.mxu0 0
        %804 = vmatpush1.bf16.msra.mxu0 0
        %805 = vmatprep.subr.bf16.mxu0 0
        %806 = vmatpush1.bf16.msra.mxu0 0
        %807 = vmatprep.subr.bf16.mxu0 0
        %808 = vmatpush1.bf16.msra.mxu0 0
        %809 = vmatprep.subr.bf16.mxu0 0
        %810 = vmatpush1.bf16.msra.mxu0 0
        %811 = vmatprep.subr.bf16.mxu0 0
        %812 = vmatpush1.bf16.msra.mxu0 0
        %813 = vmatprep.subr.bf16.mxu0 0
        %814 = vmatpush1.bf16.msra.mxu0 0
        %815 = vmatprep.subr.bf16.mxu0 0
        %816 = vmatpush1.bf16.msra.mxu0 0
        %817 = vmatprep.subr.bf16.mxu0 0
        %818 = vmatpush1.bf16.msra.mxu0 0
        %819 = vmatprep.subr.bf16.mxu0 0
        %820 = vmatpush1.bf16.msra.mxu0 0
        %821 = vmatprep.subr.bf16.mxu0 0
        %822 = vmatpush1.bf16.msra.mxu0 0
        %823 = vmatprep.subr.bf16.mxu0 0
        %824 = vmatpush1.bf16.msra.mxu0 0
        %825 = vmatprep.subr.bf16.mxu0 0
        %826 = vmatpush1.bf16.msra.mxu0 0
        %827 = vmatprep.subr.bf16.mxu0 0
        %828 = vmatpush1.bf16.msra.mxu0 0
        %829 = vmatprep.mubr.bf16.mxu0 0
        %830 = vmatmul.mubr.bf16.gmra.mrb[0].mxu0 %v792
        %v831 = vpop.f32.mrb[0].mxu0
        %v832 = vadd.f32 0.0, %v831
        %v833 = vpop.f32.mrb[0].mxu0
        %v834 = vpop.f32.mrb[0].mxu0
        %v835 = vpop.f32.mrb[0].mxu0
        %836 = vdwg.mxu0
        %v837 = vpack.c.bf16 %v832, %v784
        %839 = vrot.lane.b32.xlu0 %v837, 8
        %v840 = vpop.permute.xlu0 %839
        %vm842 = vcmask 130112
        %843 = vst.msk [vmem:[#allocation2] sm:$0xff] %vm842, %v840
        %844 = vrot.lane.b32.xlu0 %v389, 112
        %v845 = vpop.permute.xlu0 %844
        %846 = vrot.lane.b32.xlu0 %v389, 80
        %v847 = vpop.permute.xlu0 %846
        %v849 = vsel %vm393, %v845, 0
        %v852 = vsel %vm393, %v847, 0
        %854 = vmatprep.subr.bf16.mxu0 0
        %855 = vmatpush1.bf16.xpose.msra.mxu0 %v852
        %856 = vmatprep.subr.bf16.mxu0 0
        %857 = vmatpush1.bf16.xpose.msra.mxu0 0
        %858 = vmatprep.subr.bf16.mxu0 0
        %859 = vmatpush1.bf16.xpose.msra.mxu0 0
        %860 = vmatprep.subr.bf16.mxu0 0
        %861 = vmatpush1.bf16.xpose.msra.mxu0 0
        %862 = vmatprep.subr.bf16.mxu0 0
        %863 = vmatpush1.bf16.xpose.msra.mxu0 0
        %864 = vmatprep.subr.bf16.mxu0 0
        %865 = vmatpush1.bf16.xpose.msra.mxu0 0
        %866 = vmatprep.subr.bf16.mxu0 0
        %867 = vmatpush1.bf16.xpose.msra.mxu0 0
        %868 = vmatprep.subr.bf16.mxu0 0
        %869 = vmatpush1.bf16.xpose.msra.mxu0 0
        %870 = vmatprep.subr.bf16.mxu0 0
        %871 = vmatpush1.bf16.xpose.msra.mxu0 0
        %872 = vmatprep.subr.bf16.mxu0 0
        %873 = vmatpush1.bf16.xpose.msra.mxu0 0
        %874 = vmatprep.subr.bf16.mxu0 0
        %875 = vmatpush1.bf16.xpose.msra.mxu0 0
        %876 = vmatprep.subr.bf16.mxu0 0
        %877 = vmatpush1.bf16.xpose.msra.mxu0 0
        %878 = vmatprep.subr.bf16.mxu0 0
        %879 = vmatpush1.bf16.xpose.msra.mxu0 0
        %880 = vmatprep.subr.bf16.mxu0 0
        %881 = vmatpush1.bf16.xpose.msra.mxu0 0
        %882 = vmatprep.subr.bf16.mxu0 0
        %883 = vmatpush1.bf16.xpose.msra.mxu0 0
        %884 = vmatprep.subr.bf16.mxu0 0
        %885 = vmatpush1.bf16.xpose.msra.mxu0 0
        %886 = vmatprep.mubr.bf16.mxu0 0
        %887 = vmatmul.mubr.bf16.gmra.mrb[0].mxu0 %v849
        %v888 = vpop.f32.mrb[0].mxu0
        %v889 = vadd.f32 0.0, %v888
        %v890 = vpop.f32.mrb[0].mxu0
        %v891 = vpop.f32.mrb[0].mxu0
        %v892 = vpop.f32.mrb[0].mxu0
        %893 = vdwg.mxu0
        %894 = vrot.lane.b32.xlu0 %v390, 112
        %v895 = vpop.permute.xlu0 %894
        %896 = vrot.lane.b32.xlu0 %v390, 80
        %v897 = vpop.permute.xlu0 %896
        %v899 = vsel %vm393, %v895, 0
        %v902 = vsel %vm393, %v897, 0
        %904 = vmatprep.subr.bf16.mxu0 0
        %905 = vmatpush1.bf16.xpose.msra.mxu0 %v902
        %906 = vmatprep.subr.bf16.mxu0 0
        %907 = vmatpush1.bf16.xpose.msra.mxu0 0
        %908 = vmatprep.subr.bf16.mxu0 0
        %909 = vmatpush1.bf16.xpose.msra.mxu0 0
        %910 = vmatprep.subr.bf16.mxu0 0
        %911 = vmatpush1.bf16.xpose.msra.mxu0 0
        %912 = vmatprep.subr.bf16.mxu0 0
        %913 = vmatpush1.bf16.xpose.msra.mxu0 0
        %914 = vmatprep.subr.bf16.mxu0 0
        %915 = vmatpush1.bf16.xpose.msra.mxu0 0
        %916 = vmatprep.subr.bf16.mxu0 0
        %917 = vmatpush1.bf16.xpose.msra.mxu0 0
        %918 = vmatprep.subr.bf16.mxu0 0
        %919 = vmatpush1.bf16.xpose.msra.mxu0 0
        %920 = vmatprep.subr.bf16.mxu0 0
        %921 = vmatpush1.bf16.xpose.msra.mxu0 0
        %922 = vmatprep.subr.bf16.mxu0 0
        %923 = vmatpush1.bf16.xpose.msra.mxu0 0
        %924 = vmatprep.subr.bf16.mxu0 0
        %925 = vmatpush1.bf16.xpose.msra.mxu0 0
        %926 = vmatprep.subr.bf16.mxu0 0
        %927 = vmatpush1.bf16.xpose.msra.mxu0 0
        %928 = vmatprep.subr.bf16.mxu0 0
        %929 = vmatpush1.bf16.xpose.msra.mxu0 0
        %930 = vmatprep.subr.bf16.mxu0 0
        %931 = vmatpush1.bf16.xpose.msra.mxu0 0
        %932 = vmatprep.subr.bf16.mxu0 0
        %933 = vmatpush1.bf16.xpose.msra.mxu0 0
        %934 = vmatprep.subr.bf16.mxu0 0
        %935 = vmatpush1.bf16.xpose.msra.mxu0 0
        %936 = vmatprep.mubr.bf16.mxu0 0
        %937 = vmatmul.mubr.bf16.gmra.mrb[0].mxu0 %v899
        %v938 = vpop.f32.mrb[0].mxu0
        %v939 = vadd.f32 0.0, %v938
        %v940 = vpop.f32.mrb[0].mxu0
        %v941 = vpop.f32.mrb[0].mxu0
        %v942 = vpop.f32.mrb[0].mxu0
        %943 = vdwg.mxu0
        %v944 = vsel %vm393, %v889, -inf
        %945 = vmax.xlane.f32.xlu0 %v944
        %v946 = vpop.xlane.xlu0 %945
        %v947 = vsel %vm393, %v939, -inf
        %948 = vmax.xlane.f32.xlu0 %v947
        %v949 = vpop.xlane.xlu0 %948
        %v950 = vsub.f32 %v889, %v946
        %v951 = vsub.f32 %v939, %v949
        %v952 = vmul.f32 %v950, 1.442695
        %v953 = vpow.pop %v952
        %v954 = vmul.f32 %v951, 1.442695
        %v955 = vpow.pop %v954
        %v956 = vsel %vm393, %v953, 0.0
        %957 = vadd.xlane.f32.xlu0 %v956
        %v958 = vpop.xlane.xlu0 %957
        %v959 = vsel %vm393, %v955, 0.0
        %960 = vadd.xlane.f32.xlu0 %v959
        %v961 = vpop.xlane.xlu0 %960
        %v962 = vrcp.pop %v958
        %v963 = vrcp.pop %v961
        %v964 = vmul.f32 %v953, %v962
        %v965 = vmul.f32 %v955, %v963
        %v966 = vpack.c.bf16 %v964, %v964
        %v967 = vpack.c.bf16 %v965, %v965
        %s968 = scalar_lea.vmem %s309, 8 [#allocation10]
        %969 = vst.msk [vmem:[%s968] sm:$0xf] %vm512, %v966
        %970 = vst.msk [vmem:[%s968 + $0x10] sm:$0xf] %vm512, %v967
        %971 = vrot.lane.b32.xlu0 %v389, 48
        %v972 = vpop.permute.xlu0 %971
        %v974 = vsel %vm393, %v966, 0
        %v977 = vsel %vm520, %v972, 0
        %979 = vmatprep.subr.bf16.mxu0 0
        %980 = vmatpush1.bf16.msra.mxu0 %v977
        %981 = vmatprep.subr.bf16.mxu0 0
        %982 = vmatpush1.bf16.msra.mxu0 0
        %983 = vmatprep.subr.bf16.mxu0 0
        %984 = vmatpush1.bf16.msra.mxu0 0
        %985 = vmatprep.subr.bf16.mxu0 0
        %986 = vmatpush1.bf16.msra.mxu0 0
        %987 = vmatprep.subr.bf16.mxu0 0
        %988 = vmatpush1.bf16.msra.mxu0 0
        %989 = vmatprep.subr.bf16.mxu0 0
        %990 = vmatpush1.bf16.msra.mxu0 0
        %991 = vmatprep.subr.bf16.mxu0 0
        %992 = vmatpush1.bf16.msra.mxu0 0
        %993 = vmatprep.subr.bf16.mxu0 0
        %994 = vmatpush1.bf16.msra.mxu0 0
        %995 = vmatprep.subr.bf16.mxu0 0
        %996 = vmatpush1.bf16.msra.mxu0 0
        %997 = vmatprep.subr.bf16.mxu0 0
        %998 = vmatpush1.bf16.msra.mxu0 0
        %999 = vmatprep.subr.bf16.mxu0 0
        %1000 = vmatpush1.bf16.msra.mxu0 0
        %1001 = vmatprep.subr.bf16.mxu0 0
        %1002 = vmatpush1.bf16.msra.mxu0 0
        %1003 = vmatprep.subr.bf16.mxu0 0
        %1004 = vmatpush1.bf16.msra.mxu0 0
        %1005 = vmatprep.subr.bf16.mxu0 0
        %1006 = vmatpush1.bf16.msra.mxu0 0
        %1007 = vmatprep.subr.bf16.mxu0 0
        %1008 = vmatpush1.bf16.msra.mxu0 0
        %1009 = vmatprep.subr.bf16.mxu0 0
        %1010 = vmatpush1.bf16.msra.mxu0 0
        %1011 = vmatprep.mubr.bf16.mxu0 0
        %1012 = vmatmul.mubr.bf16.gmra.mrb[0].mxu0 %v974
        %v1013 = vpop.f32.mrb[0].mxu0
        %v1014 = vadd.f32 0.0, %v1013
        %v1015 = vpop.f32.mrb[0].mxu0
        %v1016 = vpop.f32.mrb[0].mxu0
        %v1017 = vpop.f32.mrb[0].mxu0
        %1018 = vdwg.mxu0
        %1019 = vrot.lane.b32.xlu0 %v390, 48
        %v1020 = vpop.permute.xlu0 %1019
        %v1022 = vsel %vm393, %v967, 0
        %v1025 = vsel %vm520, %v1020, 0
        %1027 = vmatprep.subr.bf16.mxu0 0
        %1028 = vmatpush1.bf16.msra.mxu0 %v1025
        %1029 = vmatprep.subr.bf16.mxu0 0
        %1030 = vmatpush1.bf16.msra.mxu0 0
        %1031 = vmatprep.subr.bf16.mxu0 0
        %1032 = vmatpush1.bf16.msra.mxu0 0
        %1033 = vmatprep.subr.bf16.mxu0 0
        %1034 = vmatpush1.bf16.msra.mxu0 0
        %1035 = vmatprep.subr.bf16.mxu0 0
        %1036 = vmatpush1.bf16.msra.mxu0 0
        %1037 = vmatprep.subr.bf16.mxu0 0
        %1038 = vmatpush1.bf16.msra.mxu0 0
        %1039 = vmatprep.subr.bf16.mxu0 0
        %1040 = vmatpush1.bf16.msra.mxu0 0
        %1041 = vmatprep.subr.bf16.mxu0 0
        %1042 = vmatpush1.bf16.msra.mxu0 0
        %1043 = vmatprep.subr.bf16.mxu0 0
        %1044 = vmatpush1.bf16.msra.mxu0 0
        %1045 = vmatprep.subr.bf16.mxu0 0
        %1046 = vmatpush1.bf16.msra.mxu0 0
        %1047 = vmatprep.subr.bf16.mxu0 0
        %1048 = vmatpush1.bf16.msra.mxu0 0
        %1049 = vmatprep.subr.bf16.mxu0 0
        %1050 = vmatpush1.bf16.msra.mxu0 0
        %1051 = vmatprep.subr.bf16.mxu0 0
        %1052 = vmatpush1.bf16.msra.mxu0 0
        %1053 = vmatprep.subr.bf16.mxu0 0
        %1054 = vmatpush1.bf16.msra.mxu0 0
        %1055 = vmatprep.subr.bf16.mxu0 0
        %1056 = vmatpush1.bf16.msra.mxu0 0
        %1057 = vmatprep.subr.bf16.mxu0 0
        %1058 = vmatpush1.bf16.msra.mxu0 0
        %1059 = vmatprep.mubr.bf16.mxu0 0
        %1060 = vmatmul.mubr.bf16.gmra.mrb[0].mxu0 %v1022
        %v1061 = vpop.f32.mrb[0].mxu0
        %v1062 = vadd.f32 0.0, %v1061
        %v1063 = vpop.f32.mrb[0].mxu0
        %v1064 = vpop.f32.mrb[0].mxu0
        %v1065 = vpop.f32.mrb[0].mxu0
        %1066 = vdwg.mxu0
        %v1067 = vpack.c.bf16 %v1062, %v1014
        %1069 = vrot.lane.b32.xlu0 %v1067, 16
        %v1070 = vpop.permute.xlu0 %1069
        %vm1072 = vcmask 195712
        %1073 = vst.msk [vmem:[#allocation2] sm:$0xff] %vm1072, %v1070
        %1074 = vrot.lane.b32.xlu0 %v389, 104
        %v1075 = vpop.permute.xlu0 %1074
        %1076 = vrot.lane.b32.xlu0 %v389, 72
        %v1077 = vpop.permute.xlu0 %1076
        %v1079 = vsel %vm393, %v1075, 0
        %v1082 = vsel %vm393, %v1077, 0
        %1084 = vmatprep.subr.bf16.mxu0 0
        %1085 = vmatpush1.bf16.xpose.msra.mxu0 %v1082
        %1086 = vmatprep.subr.bf16.mxu0 0
        %1087 = vmatpush1.bf16.xpose.msra.mxu0 0
        %1088 = vmatprep.subr.bf16.mxu0 0
        %1089 = vmatpush1.bf16.xpose.msra.mxu0 0
        %1090 = vmatprep.subr.bf16.mxu0 0
        %1091 = vmatpush1.bf16.xpose.msra.mxu0 0
        %1092 = vmatprep.subr.bf16.mxu0 0
        %1093 = vmatpush1.bf16.xpose.msra.mxu0 0
        %1094 = vmatprep.subr.bf16.mxu0 0
        %1095 = vmatpush1.bf16.xpose.msra.mxu0 0
        %1096 = vmatprep.subr.bf16.mxu0 0
        %1097 = vmatpush1.bf16.xpose.msra.mxu0 0
        %1098 = vmatprep.subr.bf16.mxu0 0
        %1099 = vmatpush1.bf16.xpose.msra.mxu0 0
        %1100 = vmatprep.subr.bf16.mxu0 0
        %1101 = vmatpush1.bf16.xpose.msra.mxu0 0
        %1102 = vmatprep.subr.bf16.mxu0 0
        %1103 = vmatpush1.bf16.xpose.msra.mxu0 0
        %1104 = vmatprep.subr.bf16.mxu0 0
        %1105 = vmatpush1.bf16.xpose.msra.mxu0 0
        %1106 = vmatprep.subr.bf16.mxu0 0
        %1107 = vmatpush1.bf16.xpose.msra.mxu0 0
        %1108 = vmatprep.subr.bf16.mxu0 0
        %1109 = vmatpush1.bf16.xpose.msra.mxu0 0
        %1110 = vmatprep.subr.bf16.mxu0 0
        %1111 = vmatpush1.bf16.xpose.msra.mxu0 0
        %1112 = vmatprep.subr.bf16.mxu0 0
        %1113 = vmatpush1.bf16.xpose.msra.mxu0 0
        %1114 = vmatprep.subr.bf16.mxu0 0
        %1115 = vmatpush1.bf16.xpose.msra.mxu0 0
        %1116 = vmatprep.mubr.bf16.mxu0 0
        %1117 = vmatmul.mubr.bf16.gmra.mrb[0].mxu0 %v1079
        %v1118 = vpop.f32.mrb[0].mxu0
        %v1119 = vadd.f32 0.0, %v1118
        %v1120 = vpop.f32.mrb[0].mxu0
        %v1121 = vpop.f32.mrb[0].mxu0
        %v1122 = vpop.f32.mrb[0].mxu0
        %1123 = vdwg.mxu0
        %1124 = vrot.lane.b32.xlu0 %v390, 104
        %v1125 = vpop.permute.xlu0 %1124
        %1126 = vrot.lane.b32.xlu0 %v390, 72
        %v1127 = vpop.permute.xlu0 %1126
        %v1129 = vsel %vm393, %v1125, 0
        %v1132 = vsel %vm393, %v1127, 0
        %1134 = vmatprep.subr.bf16.mxu0 0
        %1135 = vmatpush1.bf16.xpose.msra.mxu0 %v1132
        %1136 = vmatprep.subr.bf16.mxu0 0
        %1137 = vmatpush1.bf16.xpose.msra.mxu0 0
        %1138 = vmatprep.subr.bf16.mxu0 0
        %1139 = vmatpush1.bf16.xpose.msra.mxu0 0
        %1140 = vmatprep.subr.bf16.mxu0 0
        %1141 = vmatpush1.bf16.xpose.msra.mxu0 0
        %1142 = vmatprep.subr.bf16.mxu0 0
        %1143 = vmatpush1.bf16.xpose.msra.mxu0 0
        %1144 = vmatprep.subr.bf16.mxu0 0
        %1145 = vmatpush1.bf16.xpose.msra.mxu0 0
        %1146 = vmatprep.subr.bf16.mxu0 0
        %1147 = vmatpush1.bf16.xpose.msra.mxu0 0
        %1148 = vmatprep.subr.bf16.mxu0 0
        %1149 = vmatpush1.bf16.xpose.msra.mxu0 0
        %1150 = vmatprep.subr.bf16.mxu0 0
        %1151 = vmatpush1.bf16.xpose.msra.mxu0 0
        %1152 = vmatprep.subr.bf16.mxu0 0
        %1153 = vmatpush1.bf16.xpose.msra.mxu0 0
        %1154 = vmatprep.subr.bf16.mxu0 0
        %1155 = vmatpush1.bf16.xpose.msra.mxu0 0
        %1156 = vmatprep.subr.bf16.mxu0 0
        %1157 = vmatpush1.bf16.xpose.msra.mxu0 0
        %1158 = vmatprep.subr.bf16.mxu0 0
        %1159 = vmatpush1.bf16.xpose.msra.mxu0 0
        %1160 = vmatprep.subr.bf16.mxu0 0
        %1161 = vmatpush1.bf16.xpose.msra.mxu0 0
        %1162 = vmatprep.subr.bf16.mxu0 0
        %1163 = vmatpush1.bf16.xpose.msra.mxu0 0
        %1164 = vmatprep.subr.bf16.mxu0 0
        %1165 = vmatpush1.bf16.xpose.msra.mxu0 0
        %1166 = vmatprep.mubr.bf16.mxu0 0
        %1167 = vmatmul.mubr.bf16.gmra.mrb[0].mxu0 %v1129
        %v1168 = vpop.f32.mrb[0].mxu0
        %v1169 = vadd.f32 0.0, %v1168
        %v1170 = vpop.f32.mrb[0].mxu0
        %v1171 = vpop.f32.mrb[0].mxu0
        %v1172 = vpop.f32.mrb[0].mxu0
        %1173 = vdwg.mxu0
        %v1174 = vsel %vm393, %v1119, -inf
        %1175 = vmax.xlane.f32.xlu0 %v1174
        %v1176 = vpop.xlane.xlu0 %1175
        %v1177 = vsel %vm393, %v1169, -inf
        %1178 = vmax.xlane.f32.xlu0 %v1177
        %v1179 = vpop.xlane.xlu0 %1178
        %v1180 = vsub.f32 %v1119, %v1176
        %v1181 = vsub.f32 %v1169, %v1179
        %v1182 = vmul.f32 %v1180, 1.442695
        %v1183 = vpow.pop %v1182
        %v1184 = vmul.f32 %v1181, 1.442695
        %v1185 = vpow.pop %v1184
        %v1186 = vsel %vm393, %v1183, 0.0
        %1187 = vadd.xlane.f32.xlu0 %v1186
        %v1188 = vpop.xlane.xlu0 %1187
        %v1189 = vsel %vm393, %v1185, 0.0
        %1190 = vadd.xlane.f32.xlu0 %v1189
        %v1191 = vpop.xlane.xlu0 %1190
        %v1192 = vrcp.pop %v1188
        %v1193 = vrcp.pop %v1191
        %v1194 = vmul.f32 %v1183, %v1192
        %v1195 = vmul.f32 %v1185, %v1193
        %v1196 = vpack.c.bf16 %v1194, %v1194
        %v1197 = vpack.c.bf16 %v1195, %v1195
        %s1198 = scalar_lea.vmem %s309, 12 [#allocation10]
        %1199 = vst.msk [vmem:[%s1198] sm:$0xf] %vm512, %v1196
        %1200 = vst.msk [vmem:[%s1198 + $0x10] sm:$0xf] %vm512, %v1197
        %1201 = vrot.lane.b32.xlu0 %v389, 40
        %v1202 = vpop.permute.xlu0 %1201
        %v1204 = vsel %vm393, %v1196, 0
        %v1207 = vsel %vm520, %v1202, 0
        %1209 = vmatprep.subr.bf16.mxu0 0
        %1210 = vmatpush1.bf16.msra.mxu0 %v1207
        %1211 = vmatprep.subr.bf16.mxu0 0
        %1212 = vmatpush1.bf16.msra.mxu0 0
        %1213 = vmatprep.subr.bf16.mxu0 0
        %1214 = vmatpush1.bf16.msra.mxu0 0
        %1215 = vmatprep.subr.bf16.mxu0 0
        %1216 = vmatpush1.bf16.msra.mxu0 0
        %1217 = vmatprep.subr.bf16.mxu0 0
        %1218 = vmatpush1.bf16.msra.mxu0 0
        %1219 = vmatprep.subr.bf16.mxu0 0
        %1220 = vmatpush1.bf16.msra.mxu0 0
        %1221 = vmatprep.subr.bf16.mxu0 0
        %1222 = vmatpush1.bf16.msra.mxu0 0
        %1223 = vmatprep.subr.bf16.mxu0 0
        %1224 = vmatpush1.bf16.msra.mxu0 0
        %1225 = vmatprep.subr.bf16.mxu0 0
        %1226 = vmatpush1.bf16.msra.mxu0 0
        %1227 = vmatprep.subr.bf16.mxu0 0
        %1228 = vmatpush1.bf16.msra.mxu0 0
        %1229 = vmatprep.subr.bf16.mxu0 0
        %1230 = vmatpush1.bf16.msra.mxu0 0
        %1231 = vmatprep.subr.bf16.mxu0 0
        %1232 = vmatpush1.bf16.msra.mxu0 0
        %1233 = vmatprep.subr.bf16.mxu0 0
        %1234 = vmatpush1.bf16.msra.mxu0 0
        %1235 = vmatprep.subr.bf16.mxu0 0
        %1236 = vmatpush1.bf16.msra.mxu0 0
        %1237 = vmatprep.subr.bf16.mxu0 0
        %1238 = vmatpush1.bf16.msra.mxu0 0
        %1239 = vmatprep.subr.bf16.mxu0 0
        %1240 = vmatpush1.bf16.msra.mxu0 0
        %1241 = vmatprep.mubr.bf16.mxu0 0
        %1242 = vmatmul.mubr.bf16.gmra.mrb[0].mxu0 %v1204
        %v1243 = vpop.f32.mrb[0].mxu0
        %v1244 = vadd.f32 0.0, %v1243
        %v1245 = vpop.f32.mrb[0].mxu0
        %v1246 = vpop.f32.mrb[0].mxu0
        %v1247 = vpop.f32.mrb[0].mxu0
        %1248 = vdwg.mxu0
        %1249 = vrot.lane.b32.xlu0 %v390, 40
        %v1250 = vpop.permute.xlu0 %1249
        %v1252 = vsel %vm393, %v1197, 0
        %v1255 = vsel %vm520, %v1250, 0
        %1257 = vmatprep.subr.bf16.mxu0 0
        %1258 = vmatpush1.bf16.msra.mxu0 %v1255
        %1259 = vmatprep.subr.bf16.mxu0 0
        %1260 = vmatpush1.bf16.msra.mxu0 0
        %1261 = vmatprep.subr.bf16.mxu0 0
        %1262 = vmatpush1.bf16.msra.mxu0 0
        %1263 = vmatprep.subr.bf16.mxu0 0
        %1264 = vmatpush1.bf16.msra.mxu0 0
        %1265 = vmatprep.subr.bf16.mxu0 0
        %1266 = vmatpush1.bf16.msra.mxu0 0
        %1267 = vmatprep.subr.bf16.mxu0 0
        %1268 = vmatpush1.bf16.msra.mxu0 0
        %1269 = vmatprep.subr.bf16.mxu0 0
        %1270 = vmatpush1.bf16.msra.mxu0 0
        %1271 = vmatprep.subr.bf16.mxu0 0
        %1272 = vmatpush1.bf16.msra.mxu0 0
        %1273 = vmatprep.subr.bf16.mxu0 0
        %1274 = vmatpush1.bf16.msra.mxu0 0
        %1275 = vmatprep.subr.bf16.mxu0 0
        %1276 = vmatpush1.bf16.msra.mxu0 0
        %1277 = vmatprep.subr.bf16.mxu0 0
        %1278 = vmatpush1.bf16.msra.mxu0 0
        %1279 = vmatprep.subr.bf16.mxu0 0
        %1280 = vmatpush1.bf16.msra.mxu0 0
        %1281 = vmatprep.subr.bf16.mxu0 0
        %1282 = vmatpush1.bf16.msra.mxu0 0
        %1283 = vmatprep.subr.bf16.mxu0 0
        %1284 = vmatpush1.bf16.msra.mxu0 0
        %1285 = vmatprep.subr.bf16.mxu0 0
        %1286 = vmatpush1.bf16.msra.mxu0 0
        %1287 = vmatprep.subr.bf16.mxu0 0
        %1288 = vmatpush1.bf16.msra.mxu0 0
        %1289 = vmatprep.mubr.bf16.mxu0 0
        %1290 = vmatmul.mubr.bf16.gmra.mrb[0].mxu0 %v1252
        %v1291 = vpop.f32.mrb[0].mxu0
        %v1292 = vadd.f32 0.0, %v1291
        %v1293 = vpop.f32.mrb[0].mxu0
        %v1294 = vpop.f32.mrb[0].mxu0
        %v1295 = vpop.f32.mrb[0].mxu0
        %1296 = vdwg.mxu0
        %v1297 = vpack.c.bf16 %v1292, %v1244
        %1299 = vrot.lane.b32.xlu0 %v1297, 24
        %v1300 = vpop.permute.xlu0 %1299
        %vm1302 = vcmask 261312
        %1303 = vst.msk [vmem:[#allocation2] sm:$0xff] %vm1302, %v1300
        %v1304 = vld [vmem:[#allocation2] sm:$0xff]
        %v1305 = vld [vmem:[#allocation8] sm:$0xf]
        %v1306 = vld [vmem:[#allocation8 + $0x4] sm:$0xf]
        %v1307 = vld [vmem:[#allocation8 + $0x8] sm:$0xf]
        %v1308 = vld [vmem:[#allocation8 + $0xc] sm:$0xf]
        %v1309 = vld [vmem:[%s4] sm:$0x1]
        %v1311 = vlaneseq
        %v1312 = vshrl.u32 %v1311, 7
        %v1313 = vsub.s32 0, %v1312
        %v1314 = vrot.slane %v1309, %v1313
        %v1320 = vunpack.c.l.b16 %v1305
        %v1321 = vunpack.c.l.b16 %v1306
        %v1322 = vunpack.c.l.b16 %v1307
        %v1323 = vunpack.c.l.b16 %v1308
        %v1324 = vpack.c.b16 %v1321, %v1320
        %v1325 = vpack.c.b16 %v1323, %v1322
        %v1329 = vsel %vm340, %v1304, 0
        %1331 = vmatprep.subr.bf16.mxu0 0
        %1332 = vmatpush1.bf16.msra.mxu0 %v1324
        %1333 = vmatprep.subr.bf16.mxu0 0
        %1334 = vmatpush1.bf16.msra.mxu0 %v1325
        %1335 = vmatprep.subr.bf16.mxu0 0
        %1336 = vmatpush1.bf16.msra.mxu0 0
        %1337 = vmatprep.subr.bf16.mxu0 0
        %1338 = vmatpush1.bf16.msra.mxu0 0
        %1339 = vmatprep.subr.bf16.mxu0 0
        %1340 = vmatpush1.bf16.msra.mxu0 0
        %1341 = vmatprep.subr.bf16.mxu0 0
        %1342 = vmatpush1.bf16.msra.mxu0 0
        %1343 = vmatprep.subr.bf16.mxu0 0
        %1344 = vmatpush1.bf16.msra.mxu0 0
        %1345 = vmatprep.subr.bf16.mxu0 0
        %1346 = vmatpush1.bf16.msra.mxu0 0
        %1347 = vmatprep.subr.bf16.mxu0 0
        %1348 = vmatpush1.bf16.msra.mxu0 0
        %1349 = vmatprep.subr.bf16.mxu0 0
        %1350 = vmatpush1.bf16.msra.mxu0 0
        %1351 = vmatprep.subr.bf16.mxu0 0
        %1352 = vmatpush1.bf16.msra.mxu0 0
        %1353 = vmatprep.subr.bf16.mxu0 0
        %1354 = vmatpush1.bf16.msra.mxu0 0
        %1355 = vmatprep.subr.bf16.mxu0 0
        %1356 = vmatpush1.bf16.msra.mxu0 0
        %1357 = vmatprep.subr.bf16.mxu0 0
        %1358 = vmatpush1.bf16.msra.mxu0 0
        %1359 = vmatprep.subr.bf16.mxu0 0
        %1360 = vmatpush1.bf16.msra.mxu0 0
        %1361 = vmatprep.subr.bf16.mxu0 0
        %1362 = vmatpush1.bf16.msra.mxu0 0
        %1363 = vmatprep.mubr.bf16.mxu0 0
        %1364 = vmatmul.mubr.bf16.gmra.mrb[0].mxu0 %v1329
        %v1365 = vpop.f32.mrb[0].mxu0
        %v1366 = vadd.f32 %v1314, %v1365
        %v1367 = vpop.f32.mrb[0].mxu0
        %v1368 = vpop.f32.mrb[0].mxu0
        %v1369 = vadd.f32 %v1314, %v1368
        %v1370 = vpop.f32.mrb[0].mxu0
        %1371 = vdwg.mxu0
        %1372 = vst.msk [vmem:[%s302] sm:$0xff] %vm340, %v1366
        %1373 = vst.msk [vmem:[%s302 + $0x8] sm:$0xff] %vm340, %v1369
        %s1374 = sand.u32 %s146, 1
        %s1375 = scalar_lea.sflag [#allocation5], %s1374
        %s1376 = sand.u32 %s146, 1
        %s1377 = smul.addr %s1376, 16
        %s1378 = scalar_lea.vmem [#allocation9], %s1377
        %s1379 = sand.u32 %s172, 1
        %s1380 = scalar_lea.sflag [#allocation11], %s1379
        %s1381 = sand.u32 %s172, 1
        %s1382 = smul.addr %s1381, 32
        %s1383 = scalar_lea.vmem [#allocation10], %s1382
        // Predicated region
        $region53: #{tpu_custom_call.1} parent=39 // pred_check
          %p1384 = pneg %p156
        $region54: #{tpu_custom_call.1} parent=39 // pred_check_branch
          %1386 = sbr.rel (%p1384) target = $region56
        $region55: #{tpu_custom_call.1} parent=39 // pred_region
          %s1387 = smul.u32 2, %s28
          %s1389 = ssub.s32 256, 256
          %1390 = vsyncadd %s1375, %s1389
          %s1391 = smul.addr %s1387, 128
          %s1392 = scalar_lea.hbm %s5, %s1391
          %s1393 = sshll.u32 %s1378, 4
          %s1394 = int_to_ptr.vmem [resolvable:$true] %s1393
          %1399 = dma.vmem_to_hbm [thread:$0]  %s1394, 256, %s1392, %s1375, 128, 128, 8
        $region56: #{tpu_custom_call.1} parent=39 // pred_fallthru
          _
        // Predicated region
        $region57: #{tpu_custom_call.1} parent=39 // pred_check
          %p1400 = pneg %p182
        $region58: #{tpu_custom_call.1} parent=39 // pred_check_branch
          %1402 = sbr.rel (%p1400) target = $region60
        $region59: #{tpu_custom_call.1} parent=39 // pred_region
          %s1403 = smul.u32 2, %s28
          %s1405 = ssub.s32 512, 512
          %1406 = vsyncadd %s1380, %s1405
          %s1407 = smul.addr %s1403, 4
          %s1408 = smul.addr %s1407, 64
          %s1409 = scalar_lea.hbm %s6, %s1408
          %s1410 = sshll.u32 %s1383, 4
          %s1411 = int_to_ptr.vmem [resolvable:$true] %s1410
          %1416 = dma.vmem_to_hbm [thread:$0]  %s1411, 512, %s1409, %s1380, 64, 64, 4
        $region60: #{tpu_custom_call.1} parent=39 // pred_fallthru
          _
      $region40: #{tpu_custom_call.1} parent=5 // pred_fallthru
        _
      %p1417 = scmp.le.s32.totalorder 2, %s23
      // Predicated region
      $region61: #{tpu_custom_call.1} parent=5 // pred_check
        %p1418 = pneg %p1417
      $region62: #{tpu_custom_call.1} parent=5 // pred_check_branch
        %1420 = sbr.rel (%p1418) target = $region64
      $region63: #{tpu_custom_call.1} parent=5 // pred_region
        %s1421 = ssub.s32 %s23, 2
        // Predicated region
        $region65: #{tpu_custom_call.1} parent=63 // pred_check
          %p1422 = pneg %p162
        $region66: #{tpu_custom_call.1} parent=63 // pred_check_branch
          %1424 = sbr.rel (%p1422) target = $region68
        $region67: #{tpu_custom_call.1} parent=63 // pred_region
          %s1425 = sand.u32 %s147, 1
          %s1426 = scalar_lea.sflag [#allocation5], %s1425
          %s1427 = sand.u32 %s147, 1
          %s1428 = smul.addr %s1427, 16
          %s1429 = scalar_lea.vmem [#allocation9], %s1428
          %1430 = dma.done %s1426, 256
        $region68: #{tpu_custom_call.1} parent=63 // pred_fallthru
          _
        // Predicated region
        $region69: #{tpu_custom_call.1} parent=63 // pred_check
          %p1431 = pneg %p188
        $region70: #{tpu_custom_call.1} parent=63 // pred_check_branch
          %1433 = sbr.rel (%p1431) target = $region72
        $region71: #{tpu_custom_call.1} parent=63 // pred_region
          %s1434 = sand.u32 %s173, 1
          %s1435 = scalar_lea.sflag [#allocation11], %s1434
          %s1436 = sand.u32 %s173, 1
          %s1437 = smul.addr %s1436, 32
          %s1438 = scalar_lea.vmem [#allocation10], %s1437
          %1439 = dma.done %s1435, 512
        $region72: #{tpu_custom_call.1} parent=63 // pred_fallthru
          _
      $region64: #{tpu_custom_call.1} parent=5 // pred_fallthru
        _
    $region6: #{tpu_custom_call.1} parent=1 // loop_footer
      %s27 = sadd.s32 1, %s23
    $region7: #{tpu_custom_call.1} parent=1 // loop_footer_branch
      %22 = sbr.rel target = $region3
    $region8: #{tpu_custom_call.1} parent=1 // loop_exit
      _
    %1440 = vsyncpa [#allocation4], 1
    %s1441 = scalar_lea.sflag [#allocation4], 1
    %1442 = vsyncpa %s1441, 1
    %1443 = vsyncpa [#allocation7], 1
    %1444 = vsyncpa [#allocation5], 1
    %s1445 = scalar_lea.sflag [#allocation5], 1
    %1446 = vsyncpa %s1445, 1
    %1447 = vsyncpa [#allocation11], 1
    %s1448 = scalar_lea.sflag [#allocation11], 1
    %1449 = vsyncpa %s1448, 1

</llo_original>
